<compile_context>
chip_gen: v7x
topology: tpu7x:2x2x1
jax: 0.10.0
libtpu: 0.0.40
codegen_flags: <defaults>
</compile_context>

<pallas_src>
import jax
import jax.numpy as jnp
from jax.experimental import pallas as pl
from jax.experimental.pallas import tpu as pltpu

IN_DIM = 3072      # 3 * 32 * 32, hard-coded by nn.Linear(3072, 64)
HIDDEN = 64
OUT_DIM = 10
OUT_PAD = 128      # lane-dense output width; wrapper slices back to 10
NEG_BIG = -1e30    # padded-logit bias so padded columns vanish under softmax


def _round_up(x, m):
    return ((x + m - 1) // m) * m


def mlp_kernel(x_ref, w1_ref, b1_ref, w2_ref, b2_ref, out_ref):
    # x_ref:  (TILE_B, 3072) f32/bf16   w1_ref: (3072, 64) bf16
    # b1_ref: (1, 64) f32               w2_ref: (64, 128) f32 (zero-padded cols)
    # b2_ref: (1, 128) f32 (-1e30 in padded cols)
    # out_ref: (TILE_B, 128) bf16
    x = x_ref[...]
    if x.dtype != jnp.bfloat16:        # static (trace-time) choice
        x = x.astype(jnp.bfloat16)     # cast in VMEM; HBM stream stays f32
    h = jnp.dot(x, w1_ref[...], preferred_element_type=jnp.float32)
    h = h + b1_ref[...]

    # dropout: identity at inference time (PyTorch eval semantics)
    # TODO(synk): training-mode dropout (p=0.5) would need pltpu.prng_random_bits.
    h = jnp.maximum(h, 0.0)

    logits = jnp.dot(h, w2_ref[...], preferred_element_type=jnp.float32)
    logits = logits + b2_ref[...]      # padded cols -> -1e30 -> exp() == 0

    # numerically stable softmax over the (padded) class axis, math in f32
    m = jnp.max(logits, axis=1, keepdims=True)
    e = jnp.exp(logits - m)
    denom = jnp.sum(e, axis=1, keepdims=True)
    out_ref[...] = (e * pl.reciprocal(denom, approx=False)).astype(out_ref.dtype)


def _choose_tile_b(B, tile_b):
    """Pick a batch tile: multiple of 8 (or the full batch), >=2 tiles when big."""
    tile_b = max(8, (tile_b // 8) * 8)
    if B > tile_b:
        return tile_b                       # grid >= 2 automatically
    if B >= 512:
        # Split so both v7x TensorCores get work even when B <= tile_b.
        return _round_up((B + 1) // 2, 8)
    return B                                # single block == full batch dim


def net_forward(x_nchw, w1, b1, w2, b2, *, tile_b=1024):
    B = x_nchw.shape[0]
    in_dim = x_nchw.shape[1] * x_nchw.shape[-2] * x_nchw.shape[-1]
    assert in_dim == IN_DIM, f"expected flattened dim {IN_DIM}, got {in_dim}"
    # No dtype cast and no pad of x here: both would add full extra HBM passes
    # over the dominant stream of a bandwidth-bound kernel.
    x_flat = x_nchw.reshape(B, in_dim)

    w1_bf = w1.astype(jnp.bfloat16)                       # tiny one-time cast
    b1_2d = b1.reshape(1, HIDDEN).astype(jnp.float32)

    # Lane-dense output: pad w2 columns with zeros and b2 with -1e30 so the
    # extra logits contribute exactly 0 to the softmax (keep logits in f32).
    w2_pad = jnp.zeros((HIDDEN, OUT_PAD), jnp.float32).at[:, :OUT_DIM].set(
        w2.astype(jnp.float32))
    b2_pad = jnp.full((1, OUT_PAD), NEG_BIG, jnp.float32).at[:, :OUT_DIM].set(
        b2.astype(jnp.float32))

    tile_b = _choose_tile_b(B, tile_b)
    grid = (pl.cdiv(B, tile_b),)

    x_bytes = x_flat.dtype.itemsize
    cost = pl.CostEstimate(
        flops=2 * B * IN_DIM * HIDDEN + 2 * B * HIDDEN * OUT_PAD,
        transcendentals=B * OUT_PAD,
        bytes_accessed=(B * IN_DIM * x_bytes            # x read
                        + B * OUT_PAD * 2                # bf16 out write
                        + IN_DIM * HIDDEN * 2            # w1 bf16
                        + (HIDDEN + 2) * OUT_PAD * 4),   # w2 + biases
    )

    out = pl.pallas_call(
        mlp_kernel,
        out_shape=jax.ShapeDtypeStruct((B, OUT_PAD), jnp.bfloat16),
        grid=grid,
        in_specs=[
            pl.BlockSpec((tile_b, IN_DIM), lambda i: (i, 0)),   # x: tiled on batch
            pl.BlockSpec((IN_DIM, HIDDEN), lambda i: (0, 0)),   # w1: VMEM-resident
            pl.BlockSpec((1, HIDDEN), lambda i: (0, 0)),        # b1
            pl.BlockSpec((HIDDEN, OUT_PAD), lambda i: (0, 0)),  # w2 (padded)
            pl.BlockSpec((1, OUT_PAD), lambda i: (0, 0)),       # b2 (padded)
        ],
        out_specs=pl.BlockSpec((tile_b, OUT_PAD), lambda i: (i, 0)),
        compiler_params=pltpu.CompilerParams(
            dimension_semantics=("parallel",),       # shard tiles across v7x TCs
            vmem_limit_bytes=48 * 1024 * 1024,       # fits v7x 64 MiB physical,
        ),                                           # > v5e 16 MiB default
        cost_estimate=cost,
    )(x_flat, w1_bf, b1_2d, w2_pad, b2_pad)

    return out[:B, :OUT_DIM]


def net_reference(x_nchw, w1, b1, w2, b2):
    # Pure-JAX reference mirroring the kernel's precision (bf16 layer-1 inputs,
    # f32 accumulation and layer-2) for a tight correctness check.
    B = x_nchw.shape[0]
    x = x_nchw.reshape(B, -1)
    h = jnp.dot(x.astype(jnp.bfloat16), w1.astype(jnp.bfloat16),
                preferred_element_type=jnp.float32) + b1.reshape(1, -1)
    h = jnp.maximum(h, 0.0)
    logits = jnp.dot(h, w2.astype(jnp.float32)) + b2.reshape(1, -1)
    return jax.nn.softmax(logits, axis=1)


def init_params(key):
    # Shapes matching nn.Linear(3072, 64) / nn.Linear(64, 10), PyTorch-style init.
    k1, k2, k3, k4 = jax.random.split(key, 4)
    bound1 = 1.0 / jnp.sqrt(3072.0)
    bound2 = 1.0 / jnp.sqrt(64.0)
    w1 = jax.random.uniform(k1, (3072, 64), jnp.float32, -bound1, bound1)
    b1 = jax.random.uniform(k2, (64,), jnp.float32, -bound1, bound1)
    w2 = jax.random.uniform(k3, (64, 10), jnp.float32, -bound2, bound2)
    b2 = jax.random.uniform(k4, (10,), jnp.float32, -bound2, bound2)
    return w1, b1, w2, b2


if __name__ == "__main__":
    key = jax.random.PRNGKey(0)
    kx, kp = jax.random.split(key)

    # Batch=2 CIFAR-shaped input (NCHW); flattened dim must be 3*32*32 = 3072
    # to match the hard-coded Linear(3072, 64).
    x = jax.random.normal(kx, (2, 3, 32, 32), jnp.float32)
    w1, b1, w2, b2 = init_params(kp)

    out = net_forward(x, w1, b1, w2, b2)
    out = jax.block_until_ready(out)

    assert out.shape == (2, 10)
    out_f32 = out.astype(jnp.float32)
    # Softmax rows sum to ~1 (bf16 output quantization -> ~1e-2 tolerance).
    assert bool(jnp.allclose(jnp.sum(out_f32, axis=1), 1.0, atol=1e-2))
    # Match the pure-JAX reference (bf16 layer-1 + bf16 output quantization).
    ref = net_reference(x, w1, b1, w2, b2)
    assert bool(jnp.allclose(out_f32, ref, rtol=2e-2, atol=5e-3))
    print("KERNEL_OK")
</pallas_src>

<mosaic_0001>
module attributes {stable_mosaic.version = 11 : i64} {
  func.func @mlp_kernel(%arg0: i32, %arg1: memref<2x3072xf32, #tpu.memory_space<vmem>>, %arg2: memref<3072x64xbf16, #tpu.memory_space<vmem>>, %arg3: memref<1x64xf32, #tpu.memory_space<vmem>>, %arg4: memref<64x128xf32, #tpu.memory_space<vmem>>, %arg5: memref<1x128xf32, #tpu.memory_space<vmem>>, %arg6: memref<2x128xbf16, #tpu.memory_space<vmem>>) attributes {dimension_semantics = [#tpu.dimension_semantics<parallel>], iteration_bounds = array<i64: 1>, scalar_prefetch = 0 : i64, scratch_operands = 0 : i64, tpu.core_type = #tpu.core_type<tc>, window_params = [{transform_indices = @transform_0, window_bounds = array<i64: 2, 3072>}, {pipeline_mode = #tpu.pipeline_mode<synchronous>, transform_indices = @transform_1, window_bounds = array<i64: 3072, 64>}, {pipeline_mode = #tpu.pipeline_mode<synchronous>, transform_indices = @transform_2, window_bounds = array<i64: 1, 64>}, {pipeline_mode = #tpu.pipeline_mode<synchronous>, transform_indices = @transform_3, window_bounds = array<i64: 64, 128>}, {pipeline_mode = #tpu.pipeline_mode<synchronous>, transform_indices = @transform_4, window_bounds = array<i64: 1, 128>}, {transform_indices = @transform_5, window_bounds = array<i64: 2, 128>}]} {
    %c0 = arith.constant 0 : index
    %c0_0 = arith.constant 0 : index
    %0 = vector.load %arg1[%c0, %c0_0] : memref<2x3072xf32, #tpu.memory_space<vmem>>, vector<2x3072xf32>
    %1 = arith.truncf %0 : vector<2x3072xf32> to vector<2x3072xbf16>
    %c0_1 = arith.constant 0 : index
    %c0_2 = arith.constant 0 : index
    %2 = vector.load %arg2[%c0_1, %c0_2] : memref<3072x64xbf16, #tpu.memory_space<vmem>>, vector<3072x64xbf16>
    %cst = arith.constant dense<0.000000e+00> : vector<2x64xf32>
    %3 = tpu.matmul %1, %2, %cst {dimension_numbers = #tpu.dot_dimension_numbers<[1], [0], [0], [1], [0, 0, 1, 1], [], []>} : vector<2x3072xbf16>, vector<3072x64xbf16>, vector<2x64xf32> -> vector<2x64xf32>
    %c0_3 = arith.constant 0 : index
    %c0_4 = arith.constant 0 : index
    %4 = vector.load %arg3[%c0_3, %c0_4] : memref<1x64xf32, #tpu.memory_space<vmem>>, vector<1x64xf32>
    %5 = vector.broadcast %4 : vector<1x64xf32> to vector<2x64xf32>
    %6 = arith.addf %3, %5 : vector<2x64xf32>
    %cst_5 = arith.constant 0.000000e+00 : f32
    %7 = vector.broadcast %cst_5 : f32 to vector<2x64xf32>
    %8 = arith.maximumf %6, %7 : vector<2x64xf32>
    %c0_6 = arith.constant 0 : index
    %c0_7 = arith.constant 0 : index
    %9 = vector.load %arg4[%c0_6, %c0_7] : memref<64x128xf32, #tpu.memory_space<vmem>>, vector<64x128xf32>
    %cst_8 = arith.constant dense<0.000000e+00> : vector<2x128xf32>
    %10 = tpu.matmul %8, %9, %cst_8 {dimension_numbers = #tpu.dot_dimension_numbers<[1], [0], [0], [1], [0, 0, 1, 1], [], []>} : vector<2x64xf32>, vector<64x128xf32>, vector<2x128xf32> -> vector<2x128xf32>
    %c0_9 = arith.constant 0 : index
    %c0_10 = arith.constant 0 : index
    %11 = vector.load %arg5[%c0_9, %c0_10] : memref<1x128xf32, #tpu.memory_space<vmem>>, vector<1x128xf32>
    %12 = vector.broadcast %11 : vector<1x128xf32> to vector<2x128xf32>
    %13 = arith.addf %10, %12 : vector<2x128xf32>
    %cst_11 = arith.constant dense<0xFF800000> : vector<2xf32>
    %14 = vector.multi_reduction <maximumf>, %13, %cst_11 [1] : vector<2x128xf32> to vector<2xf32>
    %15 = vector.shape_cast %14 : vector<2xf32> to vector<2x1xf32>
    %16 = vector.broadcast %15 : vector<2x1xf32> to vector<2x128xf32>
    %17 = arith.subf %13, %16 : vector<2x128xf32>
    %18 = math.exp %17 : vector<2x128xf32>
    %cst_12 = arith.constant dense<0.000000e+00> : vector<2xf32>
    %19 = vector.multi_reduction <add>, %18, %cst_12 [1] : vector<2x128xf32> to vector<2xf32>
    %20 = vector.shape_cast %19 : vector<2xf32> to vector<2x1xf32>
    %21 = tpu.reciprocal %20 : vector<2x1xf32> -> vector<2x1xf32>
    %22 = vector.broadcast %21 : vector<2x1xf32> to vector<2x128xf32>
    %23 = arith.mulf %18, %22 : vector<2x128xf32>
    %24 = arith.truncf %23 : vector<2x128xf32> to vector<2x128xbf16>
    %c0_13 = arith.constant 0 : index
    %c0_14 = arith.constant 0 : index
    %25 = vector.load %arg6[%c0_13, %c0_14] : memref<2x128xbf16, #tpu.memory_space<vmem>>, vector<2x128xbf16>
    tpu.vector_store %arg6[%c0_13, %c0_14], %24 {strides = array<i32>} : memref<2x128xbf16, #tpu.memory_space<vmem>>, vector<2x128xbf16>,
    return
  }
  func.func @transform_0(%arg0: i32) -> (i32, i32) {
    %c0_i32 = arith.constant 0 : i32
    %c0_i32_0 = arith.constant 0 : i32
    return %arg0, %c0_i32 : i32, i32
  }
  func.func @transform_1(%arg0: i32) -> (i32, i32) {
    %c0_i32 = arith.constant 0 : i32
    %c0_i32_0 = arith.constant 0 : i32
    %c0_i32_1 = arith.constant 0 : i32
    return %c0_i32, %c0_i32_0 : i32, i32
  }
  func.func @transform_2(%arg0: i32) -> (i32, i32) {
    %c0_i32 = arith.constant 0 : i32
    %c0_i32_0 = arith.constant 0 : i32
    %c0_i32_1 = arith.constant 0 : i32
    return %c0_i32, %c0_i32_0 : i32, i32
  }
  func.func @transform_3(%arg0: i32) -> (i32, i32) {
    %c0_i32 = arith.constant 0 : i32
    %c0_i32_0 = arith.constant 0 : i32
    %c0_i32_1 = arith.constant 0 : i32
    return %c0_i32, %c0_i32_0 : i32, i32
  }
  func.func @transform_4(%arg0: i32) -> (i32, i32) {
    %c0_i32 = arith.constant 0 : i32
    %c0_i32_0 = arith.constant 0 : i32
    %c0_i32_1 = arith.constant 0 : i32
    return %c0_i32, %c0_i32_0 : i32, i32
  }
  func.func @transform_5(%arg0: i32) -> (i32, i32) {
    %c0_i32 = arith.constant 0 : i32
    %c0_i32_0 = arith.constant 0 : i32
    return %arg0, %c0_i32 : i32, i32
  }
}

</mosaic_0001>

<llo_original>
// kernel: tpu_custom_call.1
$region0: #{tpu_custom_call.1}
  #allocation0 [shape = 'u32[]', space=smem, size = 0x4, offset = 0x4, fixed_abs, tag = 'smem constant byte address 0x4 - core index']
  #allocation1 [shape = 'u32[144,128]{1,0:T(1,128)}', space=vmem, size = 0x12000, scoped, tag = 'internal scratch']
  %s0 = inlined_call_operand.vmem [shape: f32[2,3072], index: 0, kind: input, shape index: {}]
  %s1 = inlined_call_operand.vmem [shape: bf16[3072,64], index: 1, kind: input, shape index: {}]
  %s2 = inlined_call_operand.vmem [shape: f32[1,64], index: 2, kind: input, shape index: {}]
  %s3 = inlined_call_operand.vmem [shape: f32[64,128], index: 3, kind: input, shape index: {}]
  %s4 = inlined_call_operand.vmem [shape: f32[1,128], index: 4, kind: input, shape index: {}]
  %s5 = inlined_call_operand.hbm [shape: bf16[2,128], index: 5, kind: output, shape index: {}]
  %s6 = sld [smem:[#allocation0]]
  $region30: #{tpu_custom_call.1} parent=0
    _
  %s8 = ssub.s32 1, %s6
  %s9 = scalar_select 0, %s8, %s6
  $region1: #{tpu_custom_call.1} parent=0
    #allocation2 [shape = 'u8[512]{0}', space=vmem, size = 0x400, scoped, tag = 'output window, operand 0, single buffered']
    #allocation3 [shape = 's32[1]{0}', space=sflag, size = 0x4, scoped, tag = 'scoped memory for tpu_custom_call.1']
    %10 = vsyncpa [#allocation3], 0
    // Predicated region
    $region2: #{tpu_custom_call.1} parent=1 // pred_check
      _
    $region3: #{tpu_custom_call.1} parent=1 // pred_check_branch
      %12 = sbr.rel (0) target = $region5
    $region4: #{tpu_custom_call.1} parent=1 // pred_region
      _
    $region5: #{tpu_custom_call.1} parent=1 // pred_fallthru
      _
    // Predicated region
    $region6: #{tpu_custom_call.1} parent=1 // pred_check
      _
    $region7: #{tpu_custom_call.1} parent=1 // pred_check_branch
      %14 = sbr.rel (0) target = $region9
    $region8: #{tpu_custom_call.1} parent=1 // pred_region
      _
    $region9: #{tpu_custom_call.1} parent=1 // pred_fallthru
      _
    // Predicated region
    $region10: #{tpu_custom_call.1} parent=1 // pred_check
      _
    $region11: #{tpu_custom_call.1} parent=1 // pred_check_branch
      %16 = sbr.rel (0) target = $region13
    $region12: #{tpu_custom_call.1} parent=1 // pred_region
      _
    $region13: #{tpu_custom_call.1} parent=1 // pred_fallthru
      _
    // Predicated region
    $region14: #{tpu_custom_call.1} parent=1 // pred_check
      _
    $region15: #{tpu_custom_call.1} parent=1 // pred_check_branch
      %18 = sbr.rel (0) target = $region17
    $region16: #{tpu_custom_call.1} parent=1 // pred_region
      _
    $region17: #{tpu_custom_call.1} parent=1 // pred_fallthru
      _
    // Predicated region
    $region18: #{tpu_custom_call.1} parent=1 // pred_check
      _
    $region19: #{tpu_custom_call.1} parent=1 // pred_check_branch
      %20 = sbr.rel (0) target = $region21
    $region20: #{tpu_custom_call.1} parent=1 // pred_region
      _
    $region21: #{tpu_custom_call.1} parent=1 // pred_fallthru
      _
    %v22 = vld [vmem:[%s0] sm:$0xff]
    %v23 = vld [vmem:[%s0 + $0x8] sm:$0xff]
    %v24 = vld [vmem:[%s0 + $0x10] sm:$0xff]
    %v25 = vld [vmem:[%s0 + $0x18] sm:$0xff]
    %v26 = vld [vmem:[%s0 + $0x20] sm:$0xff]
    %v27 = vld [vmem:[%s0 + $0x28] sm:$0xff]
    %v34 = vcombine.high %v22, %v22
    %v36 = vunpack.c.l.s4 1983009808
    %v37 = vunpack.c.0.s8 %v36
    %v38 = vlaneseq
    %v39 = vshrl.u32 %v38, 7
    %v40 = vsub.s32 %v37, %v39
    %v41 = vrot.slane %v22, %v40
    %v43 = vunpack.c.l.s4 1983009808
    %v44 = vunpack.c.0.s8 %v43
    %v45 = vlaneseq
    %v46 = vshrl.u32 %v45, 7
    %v47 = vsub.s32 %v44, %v46
    %v48 = vrot.slane %v34, %v47
    %v49 = vcombine.high %v41, %v41
    %v50 = vcombine.high %v48, %v48
    %v51 = vcombine.high %v23, %v23
    %v53 = vunpack.c.l.s4 1983009808
    %v54 = vunpack.c.0.s8 %v53
    %v55 = vlaneseq
    %v56 = vshrl.u32 %v55, 7
    %v57 = vsub.s32 %v54, %v56
    %v58 = vrot.slane %v23, %v57
    %v60 = vunpack.c.l.s4 1983009808
    %v61 = vunpack.c.0.s8 %v60
    %v62 = vlaneseq
    %v63 = vshrl.u32 %v62, 7
    %v64 = vsub.s32 %v61, %v63
    %v65 = vrot.slane %v51, %v64
    %v66 = vcombine.high %v58, %v58
    %v67 = vcombine.high %v65, %v65
    %v68 = vcombine.high %v24, %v24
    %v70 = vunpack.c.l.s4 1983009808
    %v71 = vunpack.c.0.s8 %v70
    %v72 = vlaneseq
    %v73 = vshrl.u32 %v72, 7
    %v74 = vsub.s32 %v71, %v73
    %v75 = vrot.slane %v24, %v74
    %v77 = vunpack.c.l.s4 1983009808
    %v78 = vunpack.c.0.s8 %v77
    %v79 = vlaneseq
    %v80 = vshrl.u32 %v79, 7
    %v81 = vsub.s32 %v78, %v80
    %v82 = vrot.slane %v68, %v81
    %v83 = vcombine.high %v75, %v75
    %v84 = vcombine.high %v82, %v82
    %v85 = vcombine.high %v25, %v25
    %v87 = vunpack.c.l.s4 1983009808
    %v88 = vunpack.c.0.s8 %v87
    %v89 = vlaneseq
    %v90 = vshrl.u32 %v89, 7
    %v91 = vsub.s32 %v88, %v90
    %v92 = vrot.slane %v25, %v91
    %v94 = vunpack.c.l.s4 1983009808
    %v95 = vunpack.c.0.s8 %v94
    %v96 = vlaneseq
    %v97 = vshrl.u32 %v96, 7
    %v98 = vsub.s32 %v95, %v97
    %v99 = vrot.slane %v85, %v98
    %v100 = vcombine.high %v92, %v92
    %v101 = vcombine.high %v99, %v99
    %v102 = vcombine.high %v26, %v26
    %v104 = vunpack.c.l.s4 1983009808
    %v105 = vunpack.c.0.s8 %v104
    %v106 = vlaneseq
    %v107 = vshrl.u32 %v106, 7
    %v108 = vsub.s32 %v105, %v107
    %v109 = vrot.slane %v26, %v108
    %v111 = vunpack.c.l.s4 1983009808
    %v112 = vunpack.c.0.s8 %v111
    %v113 = vlaneseq
    %v114 = vshrl.u32 %v113, 7
    %v115 = vsub.s32 %v112, %v114
    %v116 = vrot.slane %v102, %v115
    %v117 = vcombine.high %v109, %v109
    %v118 = vcombine.high %v116, %v116
    %v119 = vcombine.high %v27, %v27
    %v121 = vunpack.c.l.s4 1983009808
    %v122 = vunpack.c.0.s8 %v121
    %v123 = vlaneseq
    %v124 = vshrl.u32 %v123, 7
    %v125 = vsub.s32 %v122, %v124
    %v126 = vrot.slane %v27, %v125
    %v128 = vunpack.c.l.s4 1983009808
    %v129 = vunpack.c.0.s8 %v128
    %v130 = vlaneseq
    %v131 = vshrl.u32 %v130, 7
    %v132 = vsub.s32 %v129, %v131
    %v133 = vrot.slane %v119, %v132
    %v134 = vcombine.high %v126, %v126
    %v135 = vcombine.high %v133, %v133
    %v160 = vpack.c.bf16 %v41, %v41
    %v161 = vpack.c.bf16 %v49, %v49
    %v162 = vpack.c.bf16 %v48, %v48
    %v163 = vpack.c.bf16 %v50, %v50
    %v164 = vpack.c.bf16 %v58, %v58
    %v165 = vpack.c.bf16 %v66, %v66
    %v166 = vpack.c.bf16 %v65, %v65
    %v167 = vpack.c.bf16 %v67, %v67
    %v168 = vpack.c.bf16 %v75, %v75
    %v169 = vpack.c.bf16 %v83, %v83
    %v170 = vpack.c.bf16 %v82, %v82
    %v171 = vpack.c.bf16 %v84, %v84
    %v172 = vpack.c.bf16 %v92, %v92
    %v173 = vpack.c.bf16 %v100, %v100
    %v174 = vpack.c.bf16 %v99, %v99
    %v175 = vpack.c.bf16 %v101, %v101
    %v176 = vpack.c.bf16 %v109, %v109
    %v177 = vpack.c.bf16 %v117, %v117
    %v178 = vpack.c.bf16 %v116, %v116
    %v179 = vpack.c.bf16 %v118, %v118
    %v180 = vpack.c.bf16 %v126, %v126
    %v181 = vpack.c.bf16 %v134, %v134
    %v182 = vpack.c.bf16 %v133, %v133
    %v183 = vpack.c.bf16 %v135, %v135
    %v184 = vld [vmem:[%s1] sm:$0xf]
    %v185 = vld [vmem:[%s1 + $0x4] sm:$0xf]
    %v186 = vld [vmem:[%s1 + $0x8] sm:$0xf]
    %v187 = vld [vmem:[%s1 + $0xc] sm:$0xf]
    %v188 = vld [vmem:[%s1 + $0x10] sm:$0xf]
    %v189 = vld [vmem:[%s1 + $0x14] sm:$0xf]
    %v190 = vld [vmem:[%s1 + $0x18] sm:$0xf]
    %v191 = vld [vmem:[%s1 + $0x1c] sm:$0xf]
    %v192 = vld [vmem:[%s1 + $0x20] sm:$0xf]
    %v193 = vld [vmem:[%s1 + $0x24] sm:$0xf]
    %v194 = vld [vmem:[%s1 + $0x28] sm:$0xf]
    %v195 = vld [vmem:[%s1 + $0x2c] sm:$0xf]
    %v196 = vld [vmem:[%s1 + $0x30] sm:$0xf]
    %v197 = vld [vmem:[%s1 + $0x34] sm:$0xf]
    %v198 = vld [vmem:[%s1 + $0x38] sm:$0xf]
    %v199 = vld [vmem:[%s1 + $0x3c] sm:$0xf]
    %v200 = vld [vmem:[%s1 + $0x40] sm:$0xf]
    %v201 = vld [vmem:[%s1 + $0x44] sm:$0xf]
    %v202 = vld [vmem:[%s1 + $0x48] sm:$0xf]
    %v203 = vld [vmem:[%s1 + $0x4c] sm:$0xf]
    %v204 = vld [vmem:[%s1 + $0x50] sm:$0xf]
    %v205 = vld [vmem:[%s1 + $0x54] sm:$0xf]
    %v206 = vld [vmem:[%s1 + $0x58] sm:$0xf]
    %v207 = vld [vmem:[%s1 + $0x5c] sm:$0xf]
    %v208 = vld [vmem:[%s1 + $0x60] sm:$0xf]
    %v209 = vld [vmem:[%s1 + $0x64] sm:$0xf]
    %v210 = vld [vmem:[%s1 + $0x68] sm:$0xf]
    %v211 = vld [vmem:[%s1 + $0x6c] sm:$0xf]
    %v212 = vld [vmem:[%s1 + $0x70] sm:$0xf]
    %v213 = vld [vmem:[%s1 + $0x74] sm:$0xf]
    %v214 = vld [vmem:[%s1 + $0x78] sm:$0xf]
    %v215 = vld [vmem:[%s1 + $0x7c] sm:$0xf]
    %v216 = vld [vmem:[%s1 + $0x80] sm:$0xf]
    %v217 = vld [vmem:[%s1 + $0x84] sm:$0xf]
    %v218 = vld [vmem:[%s1 + $0x88] sm:$0xf]
    %v219 = vld [vmem:[%s1 + $0x8c] sm:$0xf]
    %v220 = vld [vmem:[%s1 + $0x90] sm:$0xf]
    %v221 = vld [vmem:[%s1 + $0x94] sm:$0xf]
    %v222 = vld [vmem:[%s1 + $0x98] sm:$0xf]
    %v223 = vld [vmem:[%s1 + $0x9c] sm:$0xf]
    %v224 = vld [vmem:[%s1 + $0xa0] sm:$0xf]
    %v225 = vld [vmem:[%s1 + $0xa4] sm:$0xf]
    %v226 = vld [vmem:[%s1 + $0xa8] sm:$0xf]
    %v227 = vld [vmem:[%s1 + $0xac] sm:$0xf]
    %v228 = vld [vmem:[%s1 + $0xb0] sm:$0xf]
    %v229 = vld [vmem:[%s1 + $0xb4] sm:$0xf]
    %v230 = vld [vmem:[%s1 + $0xb8] sm:$0xf]
    %v231 = vld [vmem:[%s1 + $0xbc] sm:$0xf]
    %v232 = vld [vmem:[%s1 + $0xc0] sm:$0xf]
    %v233 = vld [vmem:[%s1 + $0xc4] sm:$0xf]
    %v234 = vld [vmem:[%s1 + $0xc8] sm:$0xf]
    %v235 = vld [vmem:[%s1 + $0xcc] sm:$0xf]
    %v236 = vld [vmem:[%s1 + $0xd0] sm:$0xf]
    %v237 = vld [vmem:[%s1 + $0xd4] sm:$0xf]
    %v238 = vld [vmem:[%s1 + $0xd8] sm:$0xf]
    %v239 = vld [vmem:[%s1 + $0xdc] sm:$0xf]
    %v240 = vld [vmem:[%s1 + $0xe0] sm:$0xf]
    %v241 = vld [vmem:[%s1 + $0xe4] sm:$0xf]
    %v242 = vld [vmem:[%s1 + $0xe8] sm:$0xf]
    %v243 = vld [vmem:[%s1 + $0xec] sm:$0xf]
    %v244 = vld [vmem:[%s1 + $0xf0] sm:$0xf]
    %v245 = vld [vmem:[%s1 + $0xf4] sm:$0xf]
    %v246 = vld [vmem:[%s1 + $0xf8] sm:$0xf]
    %v247 = vld [vmem:[%s1 + $0xfc] sm:$0xf]
    %v248 = vld [vmem:[%s1 + $0x100] sm:$0xf]
    %v249 = vld [vmem:[%s1 + $0x104] sm:$0xf]
    %v250 = vld [vmem:[%s1 + $0x108] sm:$0xf]
    %v251 = vld [vmem:[%s1 + $0x10c] sm:$0xf]
    %v252 = vld [vmem:[%s1 + $0x110] sm:$0xf]
    %v253 = vld [vmem:[%s1 + $0x114] sm:$0xf]
    %v254 = vld [vmem:[%s1 + $0x118] sm:$0xf]
    %v255 = vld [vmem:[%s1 + $0x11c] sm:$0xf]
    %v256 = vld [vmem:[%s1 + $0x120] sm:$0xf]
    %v257 = vld [vmem:[%s1 + $0x124] sm:$0xf]
    %v258 = vld [vmem:[%s1 + $0x128] sm:$0xf]
    %v259 = vld [vmem:[%s1 + $0x12c] sm:$0xf]
    %v260 = vld [vmem:[%s1 + $0x130] sm:$0xf]
    %v261 = vld [vmem:[%s1 + $0x134] sm:$0xf]
    %v262 = vld [vmem:[%s1 + $0x138] sm:$0xf]
    %v263 = vld [vmem:[%s1 + $0x13c] sm:$0xf]
    %v264 = vld [vmem:[%s1 + $0x140] sm:$0xf]
    %v265 = vld [vmem:[%s1 + $0x144] sm:$0xf]
    %v266 = vld [vmem:[%s1 + $0x148] sm:$0xf]
    %v267 = vld [vmem:[%s1 + $0x14c] sm:$0xf]
    %v268 = vld [vmem:[%s1 + $0x150] sm:$0xf]
    %v269 = vld [vmem:[%s1 + $0x154] sm:$0xf]
    %v270 = vld [vmem:[%s1 + $0x158] sm:$0xf]
    %v271 = vld [vmem:[%s1 + $0x15c] sm:$0xf]
    %v272 = vld [vmem:[%s1 + $0x160] sm:$0xf]
    %v273 = vld [vmem:[%s1 + $0x164] sm:$0xf]
    %v274 = vld [vmem:[%s1 + $0x168] sm:$0xf]
    %v275 = vld [vmem:[%s1 + $0x16c] sm:$0xf]
    %v276 = vld [vmem:[%s1 + $0x170] sm:$0xf]
    %v277 = vld [vmem:[%s1 + $0x174] sm:$0xf]
    %v278 = vld [vmem:[%s1 + $0x178] sm:$0xf]
    %v279 = vld [vmem:[%s1 + $0x17c] sm:$0xf]
    %v280 = vld [vmem:[%s1 + $0x180] sm:$0xf]
    %v281 = vld [vmem:[%s1 + $0x184] sm:$0xf]
    %v282 = vld [vmem:[%s1 + $0x188] sm:$0xf]
    %v283 = vld [vmem:[%s1 + $0x18c] sm:$0xf]
    %v284 = vld [vmem:[%s1 + $0x190] sm:$0xf]
    %v285 = vld [vmem:[%s1 + $0x194] sm:$0xf]
    %v286 = vld [vmem:[%s1 + $0x198] sm:$0xf]
    %v287 = vld [vmem:[%s1 + $0x19c] sm:$0xf]
    %v288 = vld [vmem:[%s1 + $0x1a0] sm:$0xf]
    %v289 = vld [vmem:[%s1 + $0x1a4] sm:$0xf]
    %v290 = vld [vmem:[%s1 + $0x1a8] sm:$0xf]
    %v291 = vld [vmem:[%s1 + $0x1ac] sm:$0xf]
    %v292 = vld [vmem:[%s1 + $0x1b0] sm:$0xf]
    %v293 = vld [vmem:[%s1 + $0x1b4] sm:$0xf]
    %v294 = vld [vmem:[%s1 + $0x1b8] sm:$0xf]
    %v295 = vld [vmem:[%s1 + $0x1bc] sm:$0xf]
    %v296 = vld [vmem:[%s1 + $0x1c0] sm:$0xf]
    %v297 = vld [vmem:[%s1 + $0x1c4] sm:$0xf]
    %v298 = vld [vmem:[%s1 + $0x1c8] sm:$0xf]
    %v299 = vld [vmem:[%s1 + $0x1cc] sm:$0xf]
    %v300 = vld [vmem:[%s1 + $0x1d0] sm:$0xf]
    %v301 = vld [vmem:[%s1 + $0x1d4] sm:$0xf]
    %v302 = vld [vmem:[%s1 + $0x1d8] sm:$0xf]
    %v303 = vld [vmem:[%s1 + $0x1dc] sm:$0xf]
    %v304 = vld [vmem:[%s1 + $0x1e0] sm:$0xf]
    %v305 = vld [vmem:[%s1 + $0x1e4] sm:$0xf]
    %v306 = vld [vmem:[%s1 + $0x1e8] sm:$0xf]
    %v307 = vld [vmem:[%s1 + $0x1ec] sm:$0xf]
    %v308 = vld [vmem:[%s1 + $0x1f0] sm:$0xf]
    %v309 = vld [vmem:[%s1 + $0x1f4] sm:$0xf]
    %v310 = vld [vmem:[%s1 + $0x1f8] sm:$0xf]
    %v311 = vld [vmem:[%s1 + $0x1fc] sm:$0xf]
    %v312 = vld [vmem:[%s1 + $0x200] sm:$0xf]
    %v313 = vld [vmem:[%s1 + $0x204] sm:$0xf]
    %v314 = vld [vmem:[%s1 + $0x208] sm:$0xf]
    %v315 = vld [vmem:[%s1 + $0x20c] sm:$0xf]
    %v316 = vld [vmem:[%s1 + $0x210] sm:$0xf]
    %v317 = vld [vmem:[%s1 + $0x214] sm:$0xf]
    %v318 = vld [vmem:[%s1 + $0x218] sm:$0xf]
    %v319 = vld [vmem:[%s1 + $0x21c] sm:$0xf]
    %v320 = vld [vmem:[%s1 + $0x220] sm:$0xf]
    %v321 = vld [vmem:[%s1 + $0x224] sm:$0xf]
    %v322 = vld [vmem:[%s1 + $0x228] sm:$0xf]
    %v323 = vld [vmem:[%s1 + $0x22c] sm:$0xf]
    %v324 = vld [vmem:[%s1 + $0x230] sm:$0xf]
    %v325 = vld [vmem:[%s1 + $0x234] sm:$0xf]
    %v326 = vld [vmem:[%s1 + $0x238] sm:$0xf]
    %v327 = vld [vmem:[%s1 + $0x23c] sm:$0xf]
    %v328 = vld [vmem:[%s1 + $0x240] sm:$0xf]
    %v329 = vld [vmem:[%s1 + $0x244] sm:$0xf]
    %v330 = vld [vmem:[%s1 + $0x248] sm:$0xf]
    %v331 = vld [vmem:[%s1 + $0x24c] sm:$0xf]
    %v332 = vld [vmem:[%s1 + $0x250] sm:$0xf]
    %v333 = vld [vmem:[%s1 + $0x254] sm:$0xf]
    %v334 = vld [vmem:[%s1 + $0x258] sm:$0xf]
    %v335 = vld [vmem:[%s1 + $0x25c] sm:$0xf]
    %v336 = vld [vmem:[%s1 + $0x260] sm:$0xf]
    %v337 = vld [vmem:[%s1 + $0x264] sm:$0xf]
    %v338 = vld [vmem:[%s1 + $0x268] sm:$0xf]
    %v339 = vld [vmem:[%s1 + $0x26c] sm:$0xf]
    %v340 = vld [vmem:[%s1 + $0x270] sm:$0xf]
    %v341 = vld [vmem:[%s1 + $0x274] sm:$0xf]
    %v342 = vld [vmem:[%s1 + $0x278] sm:$0xf]
    %v343 = vld [vmem:[%s1 + $0x27c] sm:$0xf]
    %v344 = vld [vmem:[%s1 + $0x280] sm:$0xf]
    %v345 = vld [vmem:[%s1 + $0x284] sm:$0xf]
    %v346 = vld [vmem:[%s1 + $0x288] sm:$0xf]
    %v347 = vld [vmem:[%s1 + $0x28c] sm:$0xf]
    %v348 = vld [vmem:[%s1 + $0x290] sm:$0xf]
    %v349 = vld [vmem:[%s1 + $0x294] sm:$0xf]
    %v350 = vld [vmem:[%s1 + $0x298] sm:$0xf]
    %v351 = vld [vmem:[%s1 + $0x29c] sm:$0xf]
    %v352 = vld [vmem:[%s1 + $0x2a0] sm:$0xf]
    %v353 = vld [vmem:[%s1 + $0x2a4] sm:$0xf]
    %v354 = vld [vmem:[%s1 + $0x2a8] sm:$0xf]
    %v355 = vld [vmem:[%s1 + $0x2ac] sm:$0xf]
    %v356 = vld [vmem:[%s1 + $0x2b0] sm:$0xf]
    %v357 = vld [vmem:[%s1 + $0x2b4] sm:$0xf]
    %v358 = vld [vmem:[%s1 + $0x2b8] sm:$0xf]
    %v359 = vld [vmem:[%s1 + $0x2bc] sm:$0xf]
    %v360 = vld [vmem:[%s1 + $0x2c0] sm:$0xf]
    %v361 = vld [vmem:[%s1 + $0x2c4] sm:$0xf]
    %v362 = vld [vmem:[%s1 + $0x2c8] sm:$0xf]
    %v363 = vld [vmem:[%s1 + $0x2cc] sm:$0xf]
    %v364 = vld [vmem:[%s1 + $0x2d0] sm:$0xf]
    %v365 = vld [vmem:[%s1 + $0x2d4] sm:$0xf]
    %v366 = vld [vmem:[%s1 + $0x2d8] sm:$0xf]
    %v367 = vld [vmem:[%s1 + $0x2dc] sm:$0xf]
    %v368 = vld [vmem:[%s1 + $0x2e0] sm:$0xf]
    %v369 = vld [vmem:[%s1 + $0x2e4] sm:$0xf]
    %v370 = vld [vmem:[%s1 + $0x2e8] sm:$0xf]
    %v371 = vld [vmem:[%s1 + $0x2ec] sm:$0xf]
    %v372 = vld [vmem:[%s1 + $0x2f0] sm:$0xf]
    %v373 = vld [vmem:[%s1 + $0x2f4] sm:$0xf]
    %v374 = vld [vmem:[%s1 + $0x2f8] sm:$0xf]
    %v375 = vld [vmem:[%s1 + $0x2fc] sm:$0xf]
    %v376 = vld [vmem:[%s1 + $0x300] sm:$0xf]
    %v377 = vld [vmem:[%s1 + $0x304] sm:$0xf]
    %v378 = vld [vmem:[%s1 + $0x308] sm:$0xf]
    %v379 = vld [vmem:[%s1 + $0x30c] sm:$0xf]
    %v380 = vld [vmem:[%s1 + $0x310] sm:$0xf]
    %v381 = vld [vmem:[%s1 + $0x314] sm:$0xf]
    %v382 = vld [vmem:[%s1 + $0x318] sm:$0xf]
    %v383 = vld [vmem:[%s1 + $0x31c] sm:$0xf]
    %v384 = vld [vmem:[%s1 + $0x320] sm:$0xf]
    %v385 = vld [vmem:[%s1 + $0x324] sm:$0xf]
    %v386 = vld [vmem:[%s1 + $0x328] sm:$0xf]
    %v387 = vld [vmem:[%s1 + $0x32c] sm:$0xf]
    %v388 = vld [vmem:[%s1 + $0x330] sm:$0xf]
    %v389 = vld [vmem:[%s1 + $0x334] sm:$0xf]
    %v390 = vld [vmem:[%s1 + $0x338] sm:$0xf]
    %v391 = vld [vmem:[%s1 + $0x33c] sm:$0xf]
    %v392 = vld [vmem:[%s1 + $0x340] sm:$0xf]
    %v393 = vld [vmem:[%s1 + $0x344] sm:$0xf]
    %v394 = vld [vmem:[%s1 + $0x348] sm:$0xf]
    %v395 = vld [vmem:[%s1 + $0x34c] sm:$0xf]
    %v396 = vld [vmem:[%s1 + $0x350] sm:$0xf]
    %v397 = vld [vmem:[%s1 + $0x354] sm:$0xf]
    %v398 = vld [vmem:[%s1 + $0x358] sm:$0xf]
    %v399 = vld [vmem:[%s1 + $0x35c] sm:$0xf]
    %v400 = vld [vmem:[%s1 + $0x360] sm:$0xf]
    %v401 = vld [vmem:[%s1 + $0x364] sm:$0xf]
    %v402 = vld [vmem:[%s1 + $0x368] sm:$0xf]
    %v403 = vld [vmem:[%s1 + $0x36c] sm:$0xf]
    %v404 = vld [vmem:[%s1 + $0x370] sm:$0xf]
    %v405 = vld [vmem:[%s1 + $0x374] sm:$0xf]
    %v406 = vld [vmem:[%s1 + $0x378] sm:$0xf]
    %v407 = vld [vmem:[%s1 + $0x37c] sm:$0xf]
    %v408 = vld [vmem:[%s1 + $0x380] sm:$0xf]
    %v409 = vld [vmem:[%s1 + $0x384] sm:$0xf]
    %v410 = vld [vmem:[%s1 + $0x388] sm:$0xf]
    %v411 = vld [vmem:[%s1 + $0x38c] sm:$0xf]
    %v412 = vld [vmem:[%s1 + $0x390] sm:$0xf]
    %v413 = vld [vmem:[%s1 + $0x394] sm:$0xf]
    %v414 = vld [vmem:[%s1 + $0x398] sm:$0xf]
    %v415 = vld [vmem:[%s1 + $0x39c] sm:$0xf]
    %v416 = vld [vmem:[%s1 + $0x3a0] sm:$0xf]
    %v417 = vld [vmem:[%s1 + $0x3a4] sm:$0xf]
    %v418 = vld [vmem:[%s1 + $0x3a8] sm:$0xf]
    %v419 = vld [vmem:[%s1 + $0x3ac] sm:$0xf]
    %v420 = vld [vmem:[%s1 + $0x3b0] sm:$0xf]
    %v421 = vld [vmem:[%s1 + $0x3b4] sm:$0xf]
    %v422 = vld [vmem:[%s1 + $0x3b8] sm:$0xf]
    %v423 = vld [vmem:[%s1 + $0x3bc] sm:$0xf]
    %v424 = vld [vmem:[%s1 + $0x3c0] sm:$0xf]
    %v425 = vld [vmem:[%s1 + $0x3c4] sm:$0xf]
    %v426 = vld [vmem:[%s1 + $0x3c8] sm:$0xf]
    %v427 = vld [vmem:[%s1 + $0x3cc] sm:$0xf]
    %v428 = vld [vmem:[%s1 + $0x3d0] sm:$0xf]
    %v429 = vld [vmem:[%s1 + $0x3d4] sm:$0xf]
    %v430 = vld [vmem:[%s1 + $0x3d8] sm:$0xf]
    %v431 = vld [vmem:[%s1 + $0x3dc] sm:$0xf]
    %v432 = vld [vmem:[%s1 + $0x3e0] sm:$0xf]
    %v433 = vld [vmem:[%s1 + $0x3e4] sm:$0xf]
    %v434 = vld [vmem:[%s1 + $0x3e8] sm:$0xf]
    %v435 = vld [vmem:[%s1 + $0x3ec] sm:$0xf]
    %v436 = vld [vmem:[%s1 + $0x3f0] sm:$0xf]
    %v437 = vld [vmem:[%s1 + $0x3f4] sm:$0xf]
    %v438 = vld [vmem:[%s1 + $0x3f8] sm:$0xf]
    %v439 = vld [vmem:[%s1 + $0x3fc] sm:$0xf]
    %v440 = vld [vmem:[%s1 + $0x400] sm:$0xf]
    %v441 = vld [vmem:[%s1 + $0x404] sm:$0xf]
    %v442 = vld [vmem:[%s1 + $0x408] sm:$0xf]
    %v443 = vld [vmem:[%s1 + $0x40c] sm:$0xf]
    %v444 = vld [vmem:[%s1 + $0x410] sm:$0xf]
    %v445 = vld [vmem:[%s1 + $0x414] sm:$0xf]
    %v446 = vld [vmem:[%s1 + $0x418] sm:$0xf]
    %v447 = vld [vmem:[%s1 + $0x41c] sm:$0xf]
    %v448 = vld [vmem:[%s1 + $0x420] sm:$0xf]
    %v449 = vld [vmem:[%s1 + $0x424] sm:$0xf]
    %v450 = vld [vmem:[%s1 + $0x428] sm:$0xf]
    %v451 = vld [vmem:[%s1 + $0x42c] sm:$0xf]
    %v452 = vld [vmem:[%s1 + $0x430] sm:$0xf]
    %v453 = vld [vmem:[%s1 + $0x434] sm:$0xf]
    %v454 = vld [vmem:[%s1 + $0x438] sm:$0xf]
    %v455 = vld [vmem:[%s1 + $0x43c] sm:$0xf]
    %v456 = vld [vmem:[%s1 + $0x440] sm:$0xf]
    %v457 = vld [vmem:[%s1 + $0x444] sm:$0xf]
    %v458 = vld [vmem:[%s1 + $0x448] sm:$0xf]
    %v459 = vld [vmem:[%s1 + $0x44c] sm:$0xf]
    %v460 = vld [vmem:[%s1 + $0x450] sm:$0xf]
    %v461 = vld [vmem:[%s1 + $0x454] sm:$0xf]
    %v462 = vld [vmem:[%s1 + $0x458] sm:$0xf]
    %v463 = vld [vmem:[%s1 + $0x45c] sm:$0xf]
    %v464 = vld [vmem:[%s1 + $0x460] sm:$0xf]
    %v465 = vld [vmem:[%s1 + $0x464] sm:$0xf]
    %v466 = vld [vmem:[%s1 + $0x468] sm:$0xf]
    %v467 = vld [vmem:[%s1 + $0x46c] sm:$0xf]
    %v468 = vld [vmem:[%s1 + $0x470] sm:$0xf]
    %v469 = vld [vmem:[%s1 + $0x474] sm:$0xf]
    %v470 = vld [vmem:[%s1 + $0x478] sm:$0xf]
    %v471 = vld [vmem:[%s1 + $0x47c] sm:$0xf]
    %v472 = vld [vmem:[%s1 + $0x480] sm:$0xf]
    %v473 = vld [vmem:[%s1 + $0x484] sm:$0xf]
    %v474 = vld [vmem:[%s1 + $0x488] sm:$0xf]
    %v475 = vld [vmem:[%s1 + $0x48c] sm:$0xf]
    %v476 = vld [vmem:[%s1 + $0x490] sm:$0xf]
    %v477 = vld [vmem:[%s1 + $0x494] sm:$0xf]
    %v478 = vld [vmem:[%s1 + $0x498] sm:$0xf]
    %v479 = vld [vmem:[%s1 + $0x49c] sm:$0xf]
    %v480 = vld [vmem:[%s1 + $0x4a0] sm:$0xf]
    %v481 = vld [vmem:[%s1 + $0x4a4] sm:$0xf]
    %v482 = vld [vmem:[%s1 + $0x4a8] sm:$0xf]
    %v483 = vld [vmem:[%s1 + $0x4ac] sm:$0xf]
    %v484 = vld [vmem:[%s1 + $0x4b0] sm:$0xf]
    %v485 = vld [vmem:[%s1 + $0x4b4] sm:$0xf]
    %v486 = vld [vmem:[%s1 + $0x4b8] sm:$0xf]
    %v487 = vld [vmem:[%s1 + $0x4bc] sm:$0xf]
    %v488 = vld [vmem:[%s1 + $0x4c0] sm:$0xf]
    %v489 = vld [vmem:[%s1 + $0x4c4] sm:$0xf]
    %v490 = vld [vmem:[%s1 + $0x4c8] sm:$0xf]
    %v491 = vld [vmem:[%s1 + $0x4cc] sm:$0xf]
    %v492 = vld [vmem:[%s1 + $0x4d0] sm:$0xf]
    %v493 = vld [vmem:[%s1 + $0x4d4] sm:$0xf]
    %v494 = vld [vmem:[%s1 + $0x4d8] sm:$0xf]
    %v495 = vld [vmem:[%s1 + $0x4dc] sm:$0xf]
    %v496 = vld [vmem:[%s1 + $0x4e0] sm:$0xf]
    %v497 = vld [vmem:[%s1 + $0x4e4] sm:$0xf]
    %v498 = vld [vmem:[%s1 + $0x4e8] sm:$0xf]
    %v499 = vld [vmem:[%s1 + $0x4ec] sm:$0xf]
    %v500 = vld [vmem:[%s1 + $0x4f0] sm:$0xf]
    %v501 = vld [vmem:[%s1 + $0x4f4] sm:$0xf]
    %v502 = vld [vmem:[%s1 + $0x4f8] sm:$0xf]
    %v503 = vld [vmem:[%s1 + $0x4fc] sm:$0xf]
    %v504 = vld [vmem:[%s1 + $0x500] sm:$0xf]
    %v505 = vld [vmem:[%s1 + $0x504] sm:$0xf]
    %v506 = vld [vmem:[%s1 + $0x508] sm:$0xf]
    %v507 = vld [vmem:[%s1 + $0x50c] sm:$0xf]
    %v508 = vld [vmem:[%s1 + $0x510] sm:$0xf]
    %v509 = vld [vmem:[%s1 + $0x514] sm:$0xf]
    %v510 = vld [vmem:[%s1 + $0x518] sm:$0xf]
    %v511 = vld [vmem:[%s1 + $0x51c] sm:$0xf]
    %v512 = vld [vmem:[%s1 + $0x520] sm:$0xf]
    %v513 = vld [vmem:[%s1 + $0x524] sm:$0xf]
    %v514 = vld [vmem:[%s1 + $0x528] sm:$0xf]
    %v515 = vld [vmem:[%s1 + $0x52c] sm:$0xf]
    %v516 = vld [vmem:[%s1 + $0x530] sm:$0xf]
    %v517 = vld [vmem:[%s1 + $0x534] sm:$0xf]
    %v518 = vld [vmem:[%s1 + $0x538] sm:$0xf]
    %v519 = vld [vmem:[%s1 + $0x53c] sm:$0xf]
    %v520 = vld [vmem:[%s1 + $0x540] sm:$0xf]
    %v521 = vld [vmem:[%s1 + $0x544] sm:$0xf]
    %v522 = vld [vmem:[%s1 + $0x548] sm:$0xf]
    %v523 = vld [vmem:[%s1 + $0x54c] sm:$0xf]
    %v524 = vld [vmem:[%s1 + $0x550] sm:$0xf]
    %v525 = vld [vmem:[%s1 + $0x554] sm:$0xf]
    %v526 = vld [vmem:[%s1 + $0x558] sm:$0xf]
    %v527 = vld [vmem:[%s1 + $0x55c] sm:$0xf]
    %v528 = vld [vmem:[%s1 + $0x560] sm:$0xf]
    %v529 = vld [vmem:[%s1 + $0x564] sm:$0xf]
    %v530 = vld [vmem:[%s1 + $0x568] sm:$0xf]
    %v531 = vld [vmem:[%s1 + $0x56c] sm:$0xf]
    %v532 = vld [vmem:[%s1 + $0x570] sm:$0xf]
    %v533 = vld [vmem:[%s1 + $0x574] sm:$0xf]
    %v534 = vld [vmem:[%s1 + $0x578] sm:$0xf]
    %v535 = vld [vmem:[%s1 + $0x57c] sm:$0xf]
    %v536 = vld [vmem:[%s1 + $0x580] sm:$0xf]
    %v537 = vld [vmem:[%s1 + $0x584] sm:$0xf]
    %v538 = vld [vmem:[%s1 + $0x588] sm:$0xf]
    %v539 = vld [vmem:[%s1 + $0x58c] sm:$0xf]
    %v540 = vld [vmem:[%s1 + $0x590] sm:$0xf]
    %v541 = vld [vmem:[%s1 + $0x594] sm:$0xf]
    %v542 = vld [vmem:[%s1 + $0x598] sm:$0xf]
    %v543 = vld [vmem:[%s1 + $0x59c] sm:$0xf]
    %v544 = vld [vmem:[%s1 + $0x5a0] sm:$0xf]
    %v545 = vld [vmem:[%s1 + $0x5a4] sm:$0xf]
    %v546 = vld [vmem:[%s1 + $0x5a8] sm:$0xf]
    %v547 = vld [vmem:[%s1 + $0x5ac] sm:$0xf]
    %v548 = vld [vmem:[%s1 + $0x5b0] sm:$0xf]
    %v549 = vld [vmem:[%s1 + $0x5b4] sm:$0xf]
    %v550 = vld [vmem:[%s1 + $0x5b8] sm:$0xf]
    %v551 = vld [vmem:[%s1 + $0x5bc] sm:$0xf]
    %v552 = vld [vmem:[%s1 + $0x5c0] sm:$0xf]
    %v553 = vld [vmem:[%s1 + $0x5c4] sm:$0xf]
    %v554 = vld [vmem:[%s1 + $0x5c8] sm:$0xf]
    %v555 = vld [vmem:[%s1 + $0x5cc] sm:$0xf]
    %v556 = vld [vmem:[%s1 + $0x5d0] sm:$0xf]
    %v557 = vld [vmem:[%s1 + $0x5d4] sm:$0xf]
    %v558 = vld [vmem:[%s1 + $0x5d8] sm:$0xf]
    %v559 = vld [vmem:[%s1 + $0x5dc] sm:$0xf]
    %v560 = vld [vmem:[%s1 + $0x5e0] sm:$0xf]
    %v561 = vld [vmem:[%s1 + $0x5e4] sm:$0xf]
    %v562 = vld [vmem:[%s1 + $0x5e8] sm:$0xf]
    %v563 = vld [vmem:[%s1 + $0x5ec] sm:$0xf]
    %v564 = vld [vmem:[%s1 + $0x5f0] sm:$0xf]
    %v565 = vld [vmem:[%s1 + $0x5f4] sm:$0xf]
    %v566 = vld [vmem:[%s1 + $0x5f8] sm:$0xf]
    %v567 = vld [vmem:[%s1 + $0x5fc] sm:$0xf]
    %v568 = vld [vmem:[%s2] sm:$0x1]
    %v570 = vlaneseq
    %v571 = vshrl.u32 %v570, 7
    %v572 = vsub.s32 0, %v571
    %v573 = vrot.slane %v568, %v572
    %v959 = vunpack.c.l.b16 %v184
    %v960 = vunpack.c.l.b16 %v185
    %v961 = vunpack.c.l.b16 %v186
    %v962 = vunpack.c.l.b16 %v187
    %v963 = vunpack.c.l.b16 %v188
    %v964 = vunpack.c.l.b16 %v189
    %v965 = vunpack.c.l.b16 %v190
    %v966 = vunpack.c.l.b16 %v191
    %v967 = vunpack.c.l.b16 %v192
    %v968 = vunpack.c.l.b16 %v193
    %v969 = vunpack.c.l.b16 %v194
    %v970 = vunpack.c.l.b16 %v195
    %v971 = vunpack.c.l.b16 %v196
    %v972 = vunpack.c.l.b16 %v197
    %v973 = vunpack.c.l.b16 %v198
    %v974 = vunpack.c.l.b16 %v199
    %v975 = vunpack.c.l.b16 %v200
    %v976 = vunpack.c.l.b16 %v201
    %v977 = vunpack.c.l.b16 %v202
    %v978 = vunpack.c.l.b16 %v203
    %v979 = vunpack.c.l.b16 %v204
    %v980 = vunpack.c.l.b16 %v205
    %v981 = vunpack.c.l.b16 %v206
    %v982 = vunpack.c.l.b16 %v207
    %v983 = vunpack.c.l.b16 %v208
    %v984 = vunpack.c.l.b16 %v209
    %v985 = vunpack.c.l.b16 %v210
    %v986 = vunpack.c.l.b16 %v211
    %v987 = vunpack.c.l.b16 %v212
    %v988 = vunpack.c.l.b16 %v213
    %v989 = vunpack.c.l.b16 %v214
    %v990 = vunpack.c.l.b16 %v215
    %v991 = vunpack.c.l.b16 %v216
    %v992 = vunpack.c.l.b16 %v217
    %v993 = vunpack.c.l.b16 %v218
    %v994 = vunpack.c.l.b16 %v219
    %v995 = vunpack.c.l.b16 %v220
    %v996 = vunpack.c.l.b16 %v221
    %v997 = vunpack.c.l.b16 %v222
    %v998 = vunpack.c.l.b16 %v223
    %v999 = vunpack.c.l.b16 %v224
    %v1000 = vunpack.c.l.b16 %v225
    %v1001 = vunpack.c.l.b16 %v226
    %v1002 = vunpack.c.l.b16 %v227
    %v1003 = vunpack.c.l.b16 %v228
    %v1004 = vunpack.c.l.b16 %v229
    %v1005 = vunpack.c.l.b16 %v230
    %v1006 = vunpack.c.l.b16 %v231
    %v1007 = vunpack.c.l.b16 %v232
    %v1008 = vunpack.c.l.b16 %v233
    %v1009 = vunpack.c.l.b16 %v234
    %v1010 = vunpack.c.l.b16 %v235
    %v1011 = vunpack.c.l.b16 %v236
    %v1012 = vunpack.c.l.b16 %v237
    %v1013 = vunpack.c.l.b16 %v238
    %v1014 = vunpack.c.l.b16 %v239
    %v1015 = vunpack.c.l.b16 %v240
    %v1016 = vunpack.c.l.b16 %v241
    %v1017 = vunpack.c.l.b16 %v242
    %v1018 = vunpack.c.l.b16 %v243
    %v1019 = vunpack.c.l.b16 %v244
    %v1020 = vunpack.c.l.b16 %v245
    %v1021 = vunpack.c.l.b16 %v246
    %v1022 = vunpack.c.l.b16 %v247
    %v1023 = vunpack.c.l.b16 %v248
    %v1024 = vunpack.c.l.b16 %v249
    %v1025 = vunpack.c.l.b16 %v250
    %v1026 = vunpack.c.l.b16 %v251
    %v1027 = vunpack.c.l.b16 %v252
    %v1028 = vunpack.c.l.b16 %v253
    %v1029 = vunpack.c.l.b16 %v254
    %v1030 = vunpack.c.l.b16 %v255
    %v1031 = vunpack.c.l.b16 %v256
    %v1032 = vunpack.c.l.b16 %v257
    %v1033 = vunpack.c.l.b16 %v258
    %v1034 = vunpack.c.l.b16 %v259
    %v1035 = vunpack.c.l.b16 %v260
    %v1036 = vunpack.c.l.b16 %v261
    %v1037 = vunpack.c.l.b16 %v262
    %v1038 = vunpack.c.l.b16 %v263
    %v1039 = vunpack.c.l.b16 %v264
    %v1040 = vunpack.c.l.b16 %v265
    %v1041 = vunpack.c.l.b16 %v266
    %v1042 = vunpack.c.l.b16 %v267
    %v1043 = vunpack.c.l.b16 %v268
    %v1044 = vunpack.c.l.b16 %v269
    %v1045 = vunpack.c.l.b16 %v270
    %v1046 = vunpack.c.l.b16 %v271
    %v1047 = vunpack.c.l.b16 %v272
    %v1048 = vunpack.c.l.b16 %v273
    %v1049 = vunpack.c.l.b16 %v274
    %v1050 = vunpack.c.l.b16 %v275
    %v1051 = vunpack.c.l.b16 %v276
    %v1052 = vunpack.c.l.b16 %v277
    %v1053 = vunpack.c.l.b16 %v278
    %v1054 = vunpack.c.l.b16 %v279
    %v1055 = vunpack.c.l.b16 %v280
    %v1056 = vunpack.c.l.b16 %v281
    %v1057 = vunpack.c.l.b16 %v282
    %v1058 = vunpack.c.l.b16 %v283
    %v1059 = vunpack.c.l.b16 %v284
    %v1060 = vunpack.c.l.b16 %v285
    %v1061 = vunpack.c.l.b16 %v286
    %v1062 = vunpack.c.l.b16 %v287
    %v1063 = vunpack.c.l.b16 %v288
    %v1064 = vunpack.c.l.b16 %v289
    %v1065 = vunpack.c.l.b16 %v290
    %v1066 = vunpack.c.l.b16 %v291
    %v1067 = vunpack.c.l.b16 %v292
    %v1068 = vunpack.c.l.b16 %v293
    %v1069 = vunpack.c.l.b16 %v294
    %v1070 = vunpack.c.l.b16 %v295
    %v1071 = vunpack.c.l.b16 %v296
    %v1072 = vunpack.c.l.b16 %v297
    %v1073 = vunpack.c.l.b16 %v298
    %v1074 = vunpack.c.l.b16 %v299
    %v1075 = vunpack.c.l.b16 %v300
    %v1076 = vunpack.c.l.b16 %v301
    %v1077 = vunpack.c.l.b16 %v302
    %v1078 = vunpack.c.l.b16 %v303
    %v1079 = vunpack.c.l.b16 %v304
    %v1080 = vunpack.c.l.b16 %v305
    %v1081 = vunpack.c.l.b16 %v306
    %v1082 = vunpack.c.l.b16 %v307
    %v1083 = vunpack.c.l.b16 %v308
    %v1084 = vunpack.c.l.b16 %v309
    %v1085 = vunpack.c.l.b16 %v310
    %v1086 = vunpack.c.l.b16 %v311
    %v1087 = vunpack.c.l.b16 %v312
    %v1088 = vunpack.c.l.b16 %v313
    %v1089 = vunpack.c.l.b16 %v314
    %v1090 = vunpack.c.l.b16 %v315
    %v1091 = vunpack.c.l.b16 %v316
    %v1092 = vunpack.c.l.b16 %v317
    %v1093 = vunpack.c.l.b16 %v318
    %v1094 = vunpack.c.l.b16 %v319
    %v1095 = vunpack.c.l.b16 %v320
    %v1096 = vunpack.c.l.b16 %v321
    %v1097 = vunpack.c.l.b16 %v322
    %v1098 = vunpack.c.l.b16 %v323
    %v1099 = vunpack.c.l.b16 %v324
    %v1100 = vunpack.c.l.b16 %v325
    %v1101 = vunpack.c.l.b16 %v326
    %v1102 = vunpack.c.l.b16 %v327
    %v1103 = vunpack.c.l.b16 %v328
    %v1104 = vunpack.c.l.b16 %v329
    %v1105 = vunpack.c.l.b16 %v330
    %v1106 = vunpack.c.l.b16 %v331
    %v1107 = vunpack.c.l.b16 %v332
    %v1108 = vunpack.c.l.b16 %v333
    %v1109 = vunpack.c.l.b16 %v334
    %v1110 = vunpack.c.l.b16 %v335
    %v1111 = vunpack.c.l.b16 %v336
    %v1112 = vunpack.c.l.b16 %v337
    %v1113 = vunpack.c.l.b16 %v338
    %v1114 = vunpack.c.l.b16 %v339
    %v1115 = vunpack.c.l.b16 %v340
    %v1116 = vunpack.c.l.b16 %v341
    %v1117 = vunpack.c.l.b16 %v342
    %v1118 = vunpack.c.l.b16 %v343
    %v1119 = vunpack.c.l.b16 %v344
    %v1120 = vunpack.c.l.b16 %v345
    %v1121 = vunpack.c.l.b16 %v346
    %v1122 = vunpack.c.l.b16 %v347
    %v1123 = vunpack.c.l.b16 %v348
    %v1124 = vunpack.c.l.b16 %v349
    %v1125 = vunpack.c.l.b16 %v350
    %v1126 = vunpack.c.l.b16 %v351
    %v1127 = vunpack.c.l.b16 %v352
    %v1128 = vunpack.c.l.b16 %v353
    %v1129 = vunpack.c.l.b16 %v354
    %v1130 = vunpack.c.l.b16 %v355
    %v1131 = vunpack.c.l.b16 %v356
    %v1132 = vunpack.c.l.b16 %v357
    %v1133 = vunpack.c.l.b16 %v358
    %v1134 = vunpack.c.l.b16 %v359
    %v1135 = vunpack.c.l.b16 %v360
    %v1136 = vunpack.c.l.b16 %v361
    %v1137 = vunpack.c.l.b16 %v362
    %v1138 = vunpack.c.l.b16 %v363
    %v1139 = vunpack.c.l.b16 %v364
    %v1140 = vunpack.c.l.b16 %v365
    %v1141 = vunpack.c.l.b16 %v366
    %v1142 = vunpack.c.l.b16 %v367
    %v1143 = vunpack.c.l.b16 %v368
    %v1144 = vunpack.c.l.b16 %v369
    %v1145 = vunpack.c.l.b16 %v370
    %v1146 = vunpack.c.l.b16 %v371
    %v1147 = vunpack.c.l.b16 %v372
    %v1148 = vunpack.c.l.b16 %v373
    %v1149 = vunpack.c.l.b16 %v374
    %v1150 = vunpack.c.l.b16 %v375
    %v1151 = vunpack.c.l.b16 %v376
    %v1152 = vunpack.c.l.b16 %v377
    %v1153 = vunpack.c.l.b16 %v378
    %v1154 = vunpack.c.l.b16 %v379
    %v1155 = vunpack.c.l.b16 %v380
    %v1156 = vunpack.c.l.b16 %v381
    %v1157 = vunpack.c.l.b16 %v382
    %v1158 = vunpack.c.l.b16 %v383
    %v1159 = vunpack.c.l.b16 %v384
    %v1160 = vunpack.c.l.b16 %v385
    %v1161 = vunpack.c.l.b16 %v386
    %v1162 = vunpack.c.l.b16 %v387
    %v1163 = vunpack.c.l.b16 %v388
    %v1164 = vunpack.c.l.b16 %v389
    %v1165 = vunpack.c.l.b16 %v390
    %v1166 = vunpack.c.l.b16 %v391
    %v1167 = vunpack.c.l.b16 %v392
    %v1168 = vunpack.c.l.b16 %v393
    %v1169 = vunpack.c.l.b16 %v394
    %v1170 = vunpack.c.l.b16 %v395
    %v1171 = vunpack.c.l.b16 %v396
    %v1172 = vunpack.c.l.b16 %v397
    %v1173 = vunpack.c.l.b16 %v398
    %v1174 = vunpack.c.l.b16 %v399
    %v1175 = vunpack.c.l.b16 %v400
    %v1176 = vunpack.c.l.b16 %v401
    %v1177 = vunpack.c.l.b16 %v402
    %v1178 = vunpack.c.l.b16 %v403
    %v1179 = vunpack.c.l.b16 %v404
    %v1180 = vunpack.c.l.b16 %v405
    %v1181 = vunpack.c.l.b16 %v406
    %v1182 = vunpack.c.l.b16 %v407
    %v1183 = vunpack.c.l.b16 %v408
    %v1184 = vunpack.c.l.b16 %v409
    %v1185 = vunpack.c.l.b16 %v410
    %v1186 = vunpack.c.l.b16 %v411
    %v1187 = vunpack.c.l.b16 %v412
    %v1188 = vunpack.c.l.b16 %v413
    %v1189 = vunpack.c.l.b16 %v414
    %v1190 = vunpack.c.l.b16 %v415
    %v1191 = vunpack.c.l.b16 %v416
    %v1192 = vunpack.c.l.b16 %v417
    %v1193 = vunpack.c.l.b16 %v418
    %v1194 = vunpack.c.l.b16 %v419
    %v1195 = vunpack.c.l.b16 %v420
    %v1196 = vunpack.c.l.b16 %v421
    %v1197 = vunpack.c.l.b16 %v422
    %v1198 = vunpack.c.l.b16 %v423
    %v1199 = vunpack.c.l.b16 %v424
    %v1200 = vunpack.c.l.b16 %v425
    %v1201 = vunpack.c.l.b16 %v426
    %v1202 = vunpack.c.l.b16 %v427
    %v1203 = vunpack.c.l.b16 %v428
    %v1204 = vunpack.c.l.b16 %v429
    %v1205 = vunpack.c.l.b16 %v430
    %v1206 = vunpack.c.l.b16 %v431
    %v1207 = vunpack.c.l.b16 %v432
    %v1208 = vunpack.c.l.b16 %v433
    %v1209 = vunpack.c.l.b16 %v434
    %v1210 = vunpack.c.l.b16 %v435
    %v1211 = vunpack.c.l.b16 %v436
    %v1212 = vunpack.c.l.b16 %v437
    %v1213 = vunpack.c.l.b16 %v438
    %v1214 = vunpack.c.l.b16 %v439
    %v1215 = vunpack.c.l.b16 %v440
    %v1216 = vunpack.c.l.b16 %v441
    %v1217 = vunpack.c.l.b16 %v442
    %v1218 = vunpack.c.l.b16 %v443
    %v1219 = vunpack.c.l.b16 %v444
    %v1220 = vunpack.c.l.b16 %v445
    %v1221 = vunpack.c.l.b16 %v446
    %v1222 = vunpack.c.l.b16 %v447
    %v1223 = vunpack.c.l.b16 %v448
    %v1224 = vunpack.c.l.b16 %v449
    %v1225 = vunpack.c.l.b16 %v450
    %v1226 = vunpack.c.l.b16 %v451
    %v1227 = vunpack.c.l.b16 %v452
    %v1228 = vunpack.c.l.b16 %v453
    %v1229 = vunpack.c.l.b16 %v454
    %v1230 = vunpack.c.l.b16 %v455
    %v1231 = vunpack.c.l.b16 %v456
    %v1232 = vunpack.c.l.b16 %v457
    %v1233 = vunpack.c.l.b16 %v458
    %v1234 = vunpack.c.l.b16 %v459
    %v1235 = vunpack.c.l.b16 %v460
    %v1236 = vunpack.c.l.b16 %v461
    %v1237 = vunpack.c.l.b16 %v462
    %v1238 = vunpack.c.l.b16 %v463
    %v1239 = vunpack.c.l.b16 %v464
    %v1240 = vunpack.c.l.b16 %v465
    %v1241 = vunpack.c.l.b16 %v466
    %v1242 = vunpack.c.l.b16 %v467
    %v1243 = vunpack.c.l.b16 %v468
    %v1244 = vunpack.c.l.b16 %v469
    %v1245 = vunpack.c.l.b16 %v470
    %v1246 = vunpack.c.l.b16 %v471
    %v1247 = vunpack.c.l.b16 %v472
    %v1248 = vunpack.c.l.b16 %v473
    %v1249 = vunpack.c.l.b16 %v474
    %v1250 = vunpack.c.l.b16 %v475
    %v1251 = vunpack.c.l.b16 %v476
    %v1252 = vunpack.c.l.b16 %v477
    %v1253 = vunpack.c.l.b16 %v478
    %v1254 = vunpack.c.l.b16 %v479
    %v1255 = vunpack.c.l.b16 %v480
    %v1256 = vunpack.c.l.b16 %v481
    %v1257 = vunpack.c.l.b16 %v482
    %v1258 = vunpack.c.l.b16 %v483
    %v1259 = vunpack.c.l.b16 %v484
    %v1260 = vunpack.c.l.b16 %v485
    %v1261 = vunpack.c.l.b16 %v486
    %v1262 = vunpack.c.l.b16 %v487
    %v1263 = vunpack.c.l.b16 %v488
    %v1264 = vunpack.c.l.b16 %v489
    %v1265 = vunpack.c.l.b16 %v490
    %v1266 = vunpack.c.l.b16 %v491
    %v1267 = vunpack.c.l.b16 %v492
    %v1268 = vunpack.c.l.b16 %v493
    %v1269 = vunpack.c.l.b16 %v494
    %v1270 = vunpack.c.l.b16 %v495
    %v1271 = vunpack.c.l.b16 %v496
    %v1272 = vunpack.c.l.b16 %v497
    %v1273 = vunpack.c.l.b16 %v498
    %v1274 = vunpack.c.l.b16 %v499
    %v1275 = vunpack.c.l.b16 %v500
    %v1276 = vunpack.c.l.b16 %v501
    %v1277 = vunpack.c.l.b16 %v502
    %v1278 = vunpack.c.l.b16 %v503
    %v1279 = vunpack.c.l.b16 %v504
    %v1280 = vunpack.c.l.b16 %v505
    %v1281 = vunpack.c.l.b16 %v506
    %v1282 = vunpack.c.l.b16 %v507
    %v1283 = vunpack.c.l.b16 %v508
    %v1284 = vunpack.c.l.b16 %v509
    %v1285 = vunpack.c.l.b16 %v510
    %v1286 = vunpack.c.l.b16 %v511
    %v1287 = vunpack.c.l.b16 %v512
    %v1288 = vunpack.c.l.b16 %v513
    %v1289 = vunpack.c.l.b16 %v514
    %v1290 = vunpack.c.l.b16 %v515
    %v1291 = vunpack.c.l.b16 %v516
    %v1292 = vunpack.c.l.b16 %v517
    %v1293 = vunpack.c.l.b16 %v518
    %v1294 = vunpack.c.l.b16 %v519
    %v1295 = vunpack.c.l.b16 %v520
    %v1296 = vunpack.c.l.b16 %v521
    %v1297 = vunpack.c.l.b16 %v522
    %v1298 = vunpack.c.l.b16 %v523
    %v1299 = vunpack.c.l.b16 %v524
    %v1300 = vunpack.c.l.b16 %v525
    %v1301 = vunpack.c.l.b16 %v526
    %v1302 = vunpack.c.l.b16 %v527
    %v1303 = vunpack.c.l.b16 %v528
    %v1304 = vunpack.c.l.b16 %v529
    %v1305 = vunpack.c.l.b16 %v530
    %v1306 = vunpack.c.l.b16 %v531
    %v1307 = vunpack.c.l.b16 %v532
    %v1308 = vunpack.c.l.b16 %v533
    %v1309 = vunpack.c.l.b16 %v534
    %v1310 = vunpack.c.l.b16 %v535
    %v1311 = vunpack.c.l.b16 %v536
    %v1312 = vunpack.c.l.b16 %v537
    %v1313 = vunpack.c.l.b16 %v538
    %v1314 = vunpack.c.l.b16 %v539
    %v1315 = vunpack.c.l.b16 %v540
    %v1316 = vunpack.c.l.b16 %v541
    %v1317 = vunpack.c.l.b16 %v542
    %v1318 = vunpack.c.l.b16 %v543
    %v1319 = vunpack.c.l.b16 %v544
    %v1320 = vunpack.c.l.b16 %v545
    %v1321 = vunpack.c.l.b16 %v546
    %v1322 = vunpack.c.l.b16 %v547
    %v1323 = vunpack.c.l.b16 %v548
    %v1324 = vunpack.c.l.b16 %v549
    %v1325 = vunpack.c.l.b16 %v550
    %v1326 = vunpack.c.l.b16 %v551
    %v1327 = vunpack.c.l.b16 %v552
    %v1328 = vunpack.c.l.b16 %v553
    %v1329 = vunpack.c.l.b16 %v554
    %v1330 = vunpack.c.l.b16 %v555
    %v1331 = vunpack.c.l.b16 %v556
    %v1332 = vunpack.c.l.b16 %v557
    %v1333 = vunpack.c.l.b16 %v558
    %v1334 = vunpack.c.l.b16 %v559
    %v1335 = vunpack.c.l.b16 %v560
    %v1336 = vunpack.c.l.b16 %v561
    %v1337 = vunpack.c.l.b16 %v562
    %v1338 = vunpack.c.l.b16 %v563
    %v1339 = vunpack.c.l.b16 %v564
    %v1340 = vunpack.c.l.b16 %v565
    %v1341 = vunpack.c.l.b16 %v566
    %v1342 = vunpack.c.l.b16 %v567
    %v1343 = vpack.c.b16 %v960, %v959
    %v1344 = vpack.c.b16 %v962, %v961
    %v1345 = vpack.c.b16 %v964, %v963
    %v1346 = vpack.c.b16 %v966, %v965
    %v1347 = vpack.c.b16 %v968, %v967
    %v1348 = vpack.c.b16 %v970, %v969
    %v1349 = vpack.c.b16 %v972, %v971
    %v1350 = vpack.c.b16 %v974, %v973
    %v1351 = vpack.c.b16 %v976, %v975
    %v1352 = vpack.c.b16 %v978, %v977
    %v1353 = vpack.c.b16 %v980, %v979
    %v1354 = vpack.c.b16 %v982, %v981
    %v1355 = vpack.c.b16 %v984, %v983
    %v1356 = vpack.c.b16 %v986, %v985
    %v1357 = vpack.c.b16 %v988, %v987
    %v1358 = vpack.c.b16 %v990, %v989
    %v1359 = vpack.c.b16 %v992, %v991
    %v1360 = vpack.c.b16 %v994, %v993
    %v1361 = vpack.c.b16 %v996, %v995
    %v1362 = vpack.c.b16 %v998, %v997
    %v1363 = vpack.c.b16 %v1000, %v999
    %v1364 = vpack.c.b16 %v1002, %v1001
    %v1365 = vpack.c.b16 %v1004, %v1003
    %v1366 = vpack.c.b16 %v1006, %v1005
    %v1367 = vpack.c.b16 %v1008, %v1007
    %v1368 = vpack.c.b16 %v1010, %v1009
    %v1369 = vpack.c.b16 %v1012, %v1011
    %v1370 = vpack.c.b16 %v1014, %v1013
    %v1371 = vpack.c.b16 %v1016, %v1015
    %v1372 = vpack.c.b16 %v1018, %v1017
    %v1373 = vpack.c.b16 %v1020, %v1019
    %v1374 = vpack.c.b16 %v1022, %v1021
    %v1375 = vpack.c.b16 %v1024, %v1023
    %v1376 = vpack.c.b16 %v1026, %v1025
    %v1377 = vpack.c.b16 %v1028, %v1027
    %v1378 = vpack.c.b16 %v1030, %v1029
    %v1379 = vpack.c.b16 %v1032, %v1031
    %v1380 = vpack.c.b16 %v1034, %v1033
    %v1381 = vpack.c.b16 %v1036, %v1035
    %v1382 = vpack.c.b16 %v1038, %v1037
    %v1383 = vpack.c.b16 %v1040, %v1039
    %v1384 = vpack.c.b16 %v1042, %v1041
    %v1385 = vpack.c.b16 %v1044, %v1043
    %v1386 = vpack.c.b16 %v1046, %v1045
    %v1387 = vpack.c.b16 %v1048, %v1047
    %v1388 = vpack.c.b16 %v1050, %v1049
    %v1389 = vpack.c.b16 %v1052, %v1051
    %v1390 = vpack.c.b16 %v1054, %v1053
    %v1391 = vpack.c.b16 %v1056, %v1055
    %v1392 = vpack.c.b16 %v1058, %v1057
    %v1393 = vpack.c.b16 %v1060, %v1059
    %v1394 = vpack.c.b16 %v1062, %v1061
    %v1395 = vpack.c.b16 %v1064, %v1063
    %v1396 = vpack.c.b16 %v1066, %v1065
    %v1397 = vpack.c.b16 %v1068, %v1067
    %v1398 = vpack.c.b16 %v1070, %v1069
    %v1399 = vpack.c.b16 %v1072, %v1071
    %v1400 = vpack.c.b16 %v1074, %v1073
    %v1401 = vpack.c.b16 %v1076, %v1075
    %v1402 = vpack.c.b16 %v1078, %v1077
    %v1403 = vpack.c.b16 %v1080, %v1079
    %v1404 = vpack.c.b16 %v1082, %v1081
    %v1405 = vpack.c.b16 %v1084, %v1083
    %v1406 = vpack.c.b16 %v1086, %v1085
    %v1407 = vpack.c.b16 %v1088, %v1087
    %v1408 = vpack.c.b16 %v1090, %v1089
    %v1409 = vpack.c.b16 %v1092, %v1091
    %v1410 = vpack.c.b16 %v1094, %v1093
    %v1411 = vpack.c.b16 %v1096, %v1095
    %v1412 = vpack.c.b16 %v1098, %v1097
    %v1413 = vpack.c.b16 %v1100, %v1099
    %v1414 = vpack.c.b16 %v1102, %v1101
    %v1415 = vpack.c.b16 %v1104, %v1103
    %v1416 = vpack.c.b16 %v1106, %v1105
    %v1417 = vpack.c.b16 %v1108, %v1107
    %v1418 = vpack.c.b16 %v1110, %v1109
    %v1419 = vpack.c.b16 %v1112, %v1111
    %v1420 = vpack.c.b16 %v1114, %v1113
    %v1421 = vpack.c.b16 %v1116, %v1115
    %v1422 = vpack.c.b16 %v1118, %v1117
    %v1423 = vpack.c.b16 %v1120, %v1119
    %v1424 = vpack.c.b16 %v1122, %v1121
    %v1425 = vpack.c.b16 %v1124, %v1123
    %v1426 = vpack.c.b16 %v1126, %v1125
    %v1427 = vpack.c.b16 %v1128, %v1127
    %v1428 = vpack.c.b16 %v1130, %v1129
    %v1429 = vpack.c.b16 %v1132, %v1131
    %v1430 = vpack.c.b16 %v1134, %v1133
    %v1431 = vpack.c.b16 %v1136, %v1135
    %v1432 = vpack.c.b16 %v1138, %v1137
    %v1433 = vpack.c.b16 %v1140, %v1139
    %v1434 = vpack.c.b16 %v1142, %v1141
    %v1435 = vpack.c.b16 %v1144, %v1143
    %v1436 = vpack.c.b16 %v1146, %v1145
    %v1437 = vpack.c.b16 %v1148, %v1147
    %v1438 = vpack.c.b16 %v1150, %v1149
    %v1439 = vpack.c.b16 %v1152, %v1151
    %v1440 = vpack.c.b16 %v1154, %v1153
    %v1441 = vpack.c.b16 %v1156, %v1155
    %v1442 = vpack.c.b16 %v1158, %v1157
    %v1443 = vpack.c.b16 %v1160, %v1159
    %v1444 = vpack.c.b16 %v1162, %v1161
    %v1445 = vpack.c.b16 %v1164, %v1163
    %v1446 = vpack.c.b16 %v1166, %v1165
    %v1447 = vpack.c.b16 %v1168, %v1167
    %v1448 = vpack.c.b16 %v1170, %v1169
    %v1449 = vpack.c.b16 %v1172, %v1171
    %v1450 = vpack.c.b16 %v1174, %v1173
    %v1451 = vpack.c.b16 %v1176, %v1175
    %v1452 = vpack.c.b16 %v1178, %v1177
    %v1453 = vpack.c.b16 %v1180, %v1179
    %v1454 = vpack.c.b16 %v1182, %v1181
    %v1455 = vpack.c.b16 %v1184, %v1183
    %v1456 = vpack.c.b16 %v1186, %v1185
    %v1457 = vpack.c.b16 %v1188, %v1187
    %v1458 = vpack.c.b16 %v1190, %v1189
    %v1459 = vpack.c.b16 %v1192, %v1191
    %v1460 = vpack.c.b16 %v1194, %v1193
    %v1461 = vpack.c.b16 %v1196, %v1195
    %v1462 = vpack.c.b16 %v1198, %v1197
    %v1463 = vpack.c.b16 %v1200, %v1199
    %v1464 = vpack.c.b16 %v1202, %v1201
    %v1465 = vpack.c.b16 %v1204, %v1203
    %v1466 = vpack.c.b16 %v1206, %v1205
    %v1467 = vpack.c.b16 %v1208, %v1207
    %v1468 = vpack.c.b16 %v1210, %v1209
    %v1469 = vpack.c.b16 %v1212, %v1211
    %v1470 = vpack.c.b16 %v1214, %v1213
    %v1471 = vpack.c.b16 %v1216, %v1215
    %v1472 = vpack.c.b16 %v1218, %v1217
    %v1473 = vpack.c.b16 %v1220, %v1219
    %v1474 = vpack.c.b16 %v1222, %v1221
    %v1475 = vpack.c.b16 %v1224, %v1223
    %v1476 = vpack.c.b16 %v1226, %v1225
    %v1477 = vpack.c.b16 %v1228, %v1227
    %v1478 = vpack.c.b16 %v1230, %v1229
    %v1479 = vpack.c.b16 %v1232, %v1231
    %v1480 = vpack.c.b16 %v1234, %v1233
    %v1481 = vpack.c.b16 %v1236, %v1235
    %v1482 = vpack.c.b16 %v1238, %v1237
    %v1483 = vpack.c.b16 %v1240, %v1239
    %v1484 = vpack.c.b16 %v1242, %v1241
    %v1485 = vpack.c.b16 %v1244, %v1243
    %v1486 = vpack.c.b16 %v1246, %v1245
    %v1487 = vpack.c.b16 %v1248, %v1247
    %v1488 = vpack.c.b16 %v1250, %v1249
    %v1489 = vpack.c.b16 %v1252, %v1251
    %v1490 = vpack.c.b16 %v1254, %v1253
    %v1491 = vpack.c.b16 %v1256, %v1255
    %v1492 = vpack.c.b16 %v1258, %v1257
    %v1493 = vpack.c.b16 %v1260, %v1259
    %v1494 = vpack.c.b16 %v1262, %v1261
    %v1495 = vpack.c.b16 %v1264, %v1263
    %v1496 = vpack.c.b16 %v1266, %v1265
    %v1497 = vpack.c.b16 %v1268, %v1267
    %v1498 = vpack.c.b16 %v1270, %v1269
    %v1499 = vpack.c.b16 %v1272, %v1271
    %v1500 = vpack.c.b16 %v1274, %v1273
    %v1501 = vpack.c.b16 %v1276, %v1275
    %v1502 = vpack.c.b16 %v1278, %v1277
    %v1503 = vpack.c.b16 %v1280, %v1279
    %v1504 = vpack.c.b16 %v1282, %v1281
    %v1505 = vpack.c.b16 %v1284, %v1283
    %v1506 = vpack.c.b16 %v1286, %v1285
    %v1507 = vpack.c.b16 %v1288, %v1287
    %v1508 = vpack.c.b16 %v1290, %v1289
    %v1509 = vpack.c.b16 %v1292, %v1291
    %v1510 = vpack.c.b16 %v1294, %v1293
    %v1511 = vpack.c.b16 %v1296, %v1295
    %v1512 = vpack.c.b16 %v1298, %v1297
    %v1513 = vpack.c.b16 %v1300, %v1299
    %v1514 = vpack.c.b16 %v1302, %v1301
    %v1515 = vpack.c.b16 %v1304, %v1303
    %v1516 = vpack.c.b16 %v1306, %v1305
    %v1517 = vpack.c.b16 %v1308, %v1307
    %v1518 = vpack.c.b16 %v1310, %v1309
    %v1519 = vpack.c.b16 %v1312, %v1311
    %v1520 = vpack.c.b16 %v1314, %v1313
    %v1521 = vpack.c.b16 %v1316, %v1315
    %v1522 = vpack.c.b16 %v1318, %v1317
    %v1523 = vpack.c.b16 %v1320, %v1319
    %v1524 = vpack.c.b16 %v1322, %v1321
    %v1525 = vpack.c.b16 %v1324, %v1323
    %v1526 = vpack.c.b16 %v1326, %v1325
    %v1527 = vpack.c.b16 %v1328, %v1327
    %v1528 = vpack.c.b16 %v1330, %v1329
    %v1529 = vpack.c.b16 %v1332, %v1331
    %v1530 = vpack.c.b16 %v1334, %v1333
    %v1531 = vpack.c.b16 %v1336, %v1335
    %v1532 = vpack.c.b16 %v1338, %v1337
    %v1533 = vpack.c.b16 %v1340, %v1339
    %v1534 = vpack.c.b16 %v1342, %v1341
    %1727 = vmatprep.subr.bf16.mxu0 0
    %1728 = vmatpush1.bf16.msra.mxu0 %v1343
    %1729 = vmatprep.subr.bf16.mxu0 0
    %1730 = vmatpush1.bf16.msra.mxu0 %v1344
    %1731 = vmatprep.subr.bf16.mxu0 0
    %1732 = vmatpush1.bf16.msra.mxu0 %v1345
    %1733 = vmatprep.subr.bf16.mxu0 0
    %1734 = vmatpush1.bf16.msra.mxu0 %v1346
    %1735 = vmatprep.subr.bf16.mxu0 0
    %1736 = vmatpush1.bf16.msra.mxu0 %v1347
    %1737 = vmatprep.subr.bf16.mxu0 0
    %1738 = vmatpush1.bf16.msra.mxu0 %v1348
    %1739 = vmatprep.subr.bf16.mxu0 0
    %1740 = vmatpush1.bf16.msra.mxu0 %v1349
    %1741 = vmatprep.subr.bf16.mxu0 0
    %1742 = vmatpush1.bf16.msra.mxu0 %v1350
    %1743 = vmatprep.subr.bf16.mxu0 0
    %1744 = vmatpush1.bf16.msra.mxu0 %v1351
    %1745 = vmatprep.subr.bf16.mxu0 0
    %1746 = vmatpush1.bf16.msra.mxu0 %v1352
    %1747 = vmatprep.subr.bf16.mxu0 0
    %1748 = vmatpush1.bf16.msra.mxu0 %v1353
    %1749 = vmatprep.subr.bf16.mxu0 0
    %1750 = vmatpush1.bf16.msra.mxu0 %v1354
    %1751 = vmatprep.subr.bf16.mxu0 0
    %1752 = vmatpush1.bf16.msra.mxu0 %v1355
    %1753 = vmatprep.subr.bf16.mxu0 0
    %1754 = vmatpush1.bf16.msra.mxu0 %v1356
    %1755 = vmatprep.subr.bf16.mxu0 0
    %1756 = vmatpush1.bf16.msra.mxu0 %v1357
    %1757 = vmatprep.subr.bf16.mxu0 0
    %1758 = vmatpush1.bf16.msra.mxu0 %v1358
    %1759 = vmatprep.mubr.bf16.mxu0 %v161
    %1760 = vmatmul.mubr.bf16.gmra.mrb[0].mxu0 %v160
    %v1761 = vpop.f32.mrb[0].mxu0
    %v1762 = vadd.f32 %v573, %v1761
    %v1763 = vpop.f32.mrb[0].mxu0
    %v1764 = vpop.f32.mrb[0].mxu0
    %v1765 = vpop.f32.mrb[0].mxu0
    %1766 = vdwg.mxu0
    %1767 = vmatprep.subr.bf16.mxu0 0
    %1768 = vmatpush1.bf16.msra.mxu0 %v1359
    %1769 = vmatprep.subr.bf16.mxu0 0
    %1770 = vmatpush1.bf16.msra.mxu0 %v1360
    %1771 = vmatprep.subr.bf16.mxu0 0
    %1772 = vmatpush1.bf16.msra.mxu0 %v1361
    %1773 = vmatprep.subr.bf16.mxu0 0
    %1774 = vmatpush1.bf16.msra.mxu0 %v1362
    %1775 = vmatprep.subr.bf16.mxu0 0
    %1776 = vmatpush1.bf16.msra.mxu0 %v1363
    %1777 = vmatprep.subr.bf16.mxu0 0
    %1778 = vmatpush1.bf16.msra.mxu0 %v1364
    %1779 = vmatprep.subr.bf16.mxu0 0
    %1780 = vmatpush1.bf16.msra.mxu0 %v1365
    %1781 = vmatprep.subr.bf16.mxu0 0
    %1782 = vmatpush1.bf16.msra.mxu0 %v1366
    %1783 = vmatprep.subr.bf16.mxu0 0
    %1784 = vmatpush1.bf16.msra.mxu0 %v1367
    %1785 = vmatprep.subr.bf16.mxu0 0
    %1786 = vmatpush1.bf16.msra.mxu0 %v1368
    %1787 = vmatprep.subr.bf16.mxu0 0
    %1788 = vmatpush1.bf16.msra.mxu0 %v1369
    %1789 = vmatprep.subr.bf16.mxu0 0
    %1790 = vmatpush1.bf16.msra.mxu0 %v1370
    %1791 = vmatprep.subr.bf16.mxu0 0
    %1792 = vmatpush1.bf16.msra.mxu0 %v1371
    %1793 = vmatprep.subr.bf16.mxu0 0
    %1794 = vmatpush1.bf16.msra.mxu0 %v1372
    %1795 = vmatprep.subr.bf16.mxu0 0
    %1796 = vmatpush1.bf16.msra.mxu0 %v1373
    %1797 = vmatprep.subr.bf16.mxu0 0
    %1798 = vmatpush1.bf16.msra.mxu0 %v1374
    %1799 = vmatprep.mubr.bf16.mxu0 %v163
    %1800 = vmatmul.mubr.bf16.gmra.mrb[0].mxu0 %v162
    %v1801 = vpop.f32.mrb[0].mxu0
    %v1802 = vadd.f32 %v1762, %v1801
    %v1803 = vpop.f32.mrb[0].mxu0
    %v1804 = vpop.f32.mrb[0].mxu0
    %v1805 = vpop.f32.mrb[0].mxu0
    %1806 = vdwg.mxu0
    %1807 = vmatprep.subr.bf16.mxu0 0
    %1808 = vmatpush1.bf16.msra.mxu0 %v1375
    %1809 = vmatprep.subr.bf16.mxu0 0
    %1810 = vmatpush1.bf16.msra.mxu0 %v1376
    %1811 = vmatprep.subr.bf16.mxu0 0
    %1812 = vmatpush1.bf16.msra.mxu0 %v1377
    %1813 = vmatprep.subr.bf16.mxu0 0
    %1814 = vmatpush1.bf16.msra.mxu0 %v1378
    %1815 = vmatprep.subr.bf16.mxu0 0
    %1816 = vmatpush1.bf16.msra.mxu0 %v1379
    %1817 = vmatprep.subr.bf16.mxu0 0
    %1818 = vmatpush1.bf16.msra.mxu0 %v1380
    %1819 = vmatprep.subr.bf16.mxu0 0
    %1820 = vmatpush1.bf16.msra.mxu0 %v1381
    %1821 = vmatprep.subr.bf16.mxu0 0
    %1822 = vmatpush1.bf16.msra.mxu0 %v1382
    %1823 = vmatprep.subr.bf16.mxu0 0
    %1824 = vmatpush1.bf16.msra.mxu0 %v1383
    %1825 = vmatprep.subr.bf16.mxu0 0
    %1826 = vmatpush1.bf16.msra.mxu0 %v1384
    %1827 = vmatprep.subr.bf16.mxu0 0
    %1828 = vmatpush1.bf16.msra.mxu0 %v1385
    %1829 = vmatprep.subr.bf16.mxu0 0
    %1830 = vmatpush1.bf16.msra.mxu0 %v1386
    %1831 = vmatprep.subr.bf16.mxu0 0
    %1832 = vmatpush1.bf16.msra.mxu0 %v1387
    %1833 = vmatprep.subr.bf16.mxu0 0
    %1834 = vmatpush1.bf16.msra.mxu0 %v1388
    %1835 = vmatprep.subr.bf16.mxu0 0
    %1836 = vmatpush1.bf16.msra.mxu0 %v1389
    %1837 = vmatprep.subr.bf16.mxu0 0
    %1838 = vmatpush1.bf16.msra.mxu0 %v1390
    %1839 = vmatprep.mubr.bf16.mxu0 %v165
    %1840 = vmatmul.mubr.bf16.gmra.mrb[0].mxu0 %v164
    %v1841 = vpop.f32.mrb[0].mxu0
    %v1842 = vadd.f32 %v1802, %v1841
    %v1843 = vpop.f32.mrb[0].mxu0
    %v1844 = vpop.f32.mrb[0].mxu0
    %v1845 = vpop.f32.mrb[0].mxu0
    %1846 = vdwg.mxu0
    %1847 = vmatprep.subr.bf16.mxu0 0
    %1848 = vmatpush1.bf16.msra.mxu0 %v1391
    %1849 = vmatprep.subr.bf16.mxu0 0
    %1850 = vmatpush1.bf16.msra.mxu0 %v1392
    %1851 = vmatprep.subr.bf16.mxu0 0
    %1852 = vmatpush1.bf16.msra.mxu0 %v1393
    %1853 = vmatprep.subr.bf16.mxu0 0
    %1854 = vmatpush1.bf16.msra.mxu0 %v1394
    %1855 = vmatprep.subr.bf16.mxu0 0
    %1856 = vmatpush1.bf16.msra.mxu0 %v1395
    %1857 = vmatprep.subr.bf16.mxu0 0
    %1858 = vmatpush1.bf16.msra.mxu0 %v1396
    %1859 = vmatprep.subr.bf16.mxu0 0
    %1860 = vmatpush1.bf16.msra.mxu0 %v1397
    %1861 = vmatprep.subr.bf16.mxu0 0
    %1862 = vmatpush1.bf16.msra.mxu0 %v1398
    %1863 = vmatprep.subr.bf16.mxu0 0
    %1864 = vmatpush1.bf16.msra.mxu0 %v1399
    %1865 = vmatprep.subr.bf16.mxu0 0
    %1866 = vmatpush1.bf16.msra.mxu0 %v1400
    %1867 = vmatprep.subr.bf16.mxu0 0
    %1868 = vmatpush1.bf16.msra.mxu0 %v1401
    %1869 = vmatprep.subr.bf16.mxu0 0
    %1870 = vmatpush1.bf16.msra.mxu0 %v1402
    %1871 = vmatprep.subr.bf16.mxu0 0
    %1872 = vmatpush1.bf16.msra.mxu0 %v1403
    %1873 = vmatprep.subr.bf16.mxu0 0
    %1874 = vmatpush1.bf16.msra.mxu0 %v1404
    %1875 = vmatprep.subr.bf16.mxu0 0
    %1876 = vmatpush1.bf16.msra.mxu0 %v1405
    %1877 = vmatprep.subr.bf16.mxu0 0
    %1878 = vmatpush1.bf16.msra.mxu0 %v1406
    %1879 = vmatprep.mubr.bf16.mxu0 %v167
    %1880 = vmatmul.mubr.bf16.gmra.mrb[0].mxu0 %v166
    %v1881 = vpop.f32.mrb[0].mxu0
    %v1882 = vadd.f32 %v1842, %v1881
    %v1883 = vpop.f32.mrb[0].mxu0
    %v1884 = vpop.f32.mrb[0].mxu0
    %v1885 = vpop.f32.mrb[0].mxu0
    %1886 = vdwg.mxu0
    %1887 = vmatprep.subr.bf16.mxu0 0
    %1888 = vmatpush1.bf16.msra.mxu0 %v1407
    %1889 = vmatprep.subr.bf16.mxu0 0
    %1890 = vmatpush1.bf16.msra.mxu0 %v1408
    %1891 = vmatprep.subr.bf16.mxu0 0
    %1892 = vmatpush1.bf16.msra.mxu0 %v1409
    %1893 = vmatprep.subr.bf16.mxu0 0
    %1894 = vmatpush1.bf16.msra.mxu0 %v1410
    %1895 = vmatprep.subr.bf16.mxu0 0
    %1896 = vmatpush1.bf16.msra.mxu0 %v1411
    %1897 = vmatprep.subr.bf16.mxu0 0
    %1898 = vmatpush1.bf16.msra.mxu0 %v1412
    %1899 = vmatprep.subr.bf16.mxu0 0
    %1900 = vmatpush1.bf16.msra.mxu0 %v1413
    %1901 = vmatprep.subr.bf16.mxu0 0
    %1902 = vmatpush1.bf16.msra.mxu0 %v1414
    %1903 = vmatprep.subr.bf16.mxu0 0
    %1904 = vmatpush1.bf16.msra.mxu0 %v1415
    %1905 = vmatprep.subr.bf16.mxu0 0
    %1906 = vmatpush1.bf16.msra.mxu0 %v1416
    %1907 = vmatprep.subr.bf16.mxu0 0
    %1908 = vmatpush1.bf16.msra.mxu0 %v1417
    %1909 = vmatprep.subr.bf16.mxu0 0
    %1910 = vmatpush1.bf16.msra.mxu0 %v1418
    %1911 = vmatprep.subr.bf16.mxu0 0
    %1912 = vmatpush1.bf16.msra.mxu0 %v1419
    %1913 = vmatprep.subr.bf16.mxu0 0
    %1914 = vmatpush1.bf16.msra.mxu0 %v1420
    %1915 = vmatprep.subr.bf16.mxu0 0
    %1916 = vmatpush1.bf16.msra.mxu0 %v1421
    %1917 = vmatprep.subr.bf16.mxu0 0
    %1918 = vmatpush1.bf16.msra.mxu0 %v1422
    %1919 = vmatprep.mubr.bf16.mxu0 %v169
    %1920 = vmatmul.mubr.bf16.gmra.mrb[0].mxu0 %v168
    %v1921 = vpop.f32.mrb[0].mxu0
    %v1922 = vadd.f32 %v1882, %v1921
    %v1923 = vpop.f32.mrb[0].mxu0
    %v1924 = vpop.f32.mrb[0].mxu0
    %v1925 = vpop.f32.mrb[0].mxu0
    %1926 = vdwg.mxu0
    %1927 = vmatprep.subr.bf16.mxu0 0
    %1928 = vmatpush1.bf16.msra.mxu0 %v1423
    %1929 = vmatprep.subr.bf16.mxu0 0
    %1930 = vmatpush1.bf16.msra.mxu0 %v1424
    %1931 = vmatprep.subr.bf16.mxu0 0
    %1932 = vmatpush1.bf16.msra.mxu0 %v1425
    %1933 = vmatprep.subr.bf16.mxu0 0
    %1934 = vmatpush1.bf16.msra.mxu0 %v1426
    %1935 = vmatprep.subr.bf16.mxu0 0
    %1936 = vmatpush1.bf16.msra.mxu0 %v1427
    %1937 = vmatprep.subr.bf16.mxu0 0
    %1938 = vmatpush1.bf16.msra.mxu0 %v1428
    %1939 = vmatprep.subr.bf16.mxu0 0
    %1940 = vmatpush1.bf16.msra.mxu0 %v1429
    %1941 = vmatprep.subr.bf16.mxu0 0
    %1942 = vmatpush1.bf16.msra.mxu0 %v1430
    %1943 = vmatprep.subr.bf16.mxu0 0
    %1944 = vmatpush1.bf16.msra.mxu0 %v1431
    %1945 = vmatprep.subr.bf16.mxu0 0
    %1946 = vmatpush1.bf16.msra.mxu0 %v1432
    %1947 = vmatprep.subr.bf16.mxu0 0
    %1948 = vmatpush1.bf16.msra.mxu0 %v1433
    %1949 = vmatprep.subr.bf16.mxu0 0
    %1950 = vmatpush1.bf16.msra.mxu0 %v1434
    %1951 = vmatprep.subr.bf16.mxu0 0
    %1952 = vmatpush1.bf16.msra.mxu0 %v1435
    %1953 = vmatprep.subr.bf16.mxu0 0
    %1954 = vmatpush1.bf16.msra.mxu0 %v1436
    %1955 = vmatprep.subr.bf16.mxu0 0
    %1956 = vmatpush1.bf16.msra.mxu0 %v1437
    %1957 = vmatprep.subr.bf16.mxu0 0
    %1958 = vmatpush1.bf16.msra.mxu0 %v1438
    %1959 = vmatprep.mubr.bf16.mxu0 %v171
    %1960 = vmatmul.mubr.bf16.gmra.mrb[0].mxu0 %v170
    %v1961 = vpop.f32.mrb[0].mxu0
    %v1962 = vadd.f32 %v1922, %v1961
    %v1963 = vpop.f32.mrb[0].mxu0
    %v1964 = vpop.f32.mrb[0].mxu0
    %v1965 = vpop.f32.mrb[0].mxu0
    %1966 = vdwg.mxu0
    %1967 = vmatprep.subr.bf16.mxu0 0
    %1968 = vmatpush1.bf16.msra.mxu0 %v1439
    %1969 = vmatprep.subr.bf16.mxu0 0
    %1970 = vmatpush1.bf16.msra.mxu0 %v1440
    %1971 = vmatprep.subr.bf16.mxu0 0
    %1972 = vmatpush1.bf16.msra.mxu0 %v1441
    %1973 = vmatprep.subr.bf16.mxu0 0
    %1974 = vmatpush1.bf16.msra.mxu0 %v1442
    %1975 = vmatprep.subr.bf16.mxu0 0
    %1976 = vmatpush1.bf16.msra.mxu0 %v1443
    %1977 = vmatprep.subr.bf16.mxu0 0
    %1978 = vmatpush1.bf16.msra.mxu0 %v1444
    %1979 = vmatprep.subr.bf16.mxu0 0
    %1980 = vmatpush1.bf16.msra.mxu0 %v1445
    %1981 = vmatprep.subr.bf16.mxu0 0
    %1982 = vmatpush1.bf16.msra.mxu0 %v1446
    %1983 = vmatprep.subr.bf16.mxu0 0
    %1984 = vmatpush1.bf16.msra.mxu0 %v1447
    %1985 = vmatprep.subr.bf16.mxu0 0
    %1986 = vmatpush1.bf16.msra.mxu0 %v1448
    %1987 = vmatprep.subr.bf16.mxu0 0
    %1988 = vmatpush1.bf16.msra.mxu0 %v1449
    %1989 = vmatprep.subr.bf16.mxu0 0
    %1990 = vmatpush1.bf16.msra.mxu0 %v1450
    %1991 = vmatprep.subr.bf16.mxu0 0
    %1992 = vmatpush1.bf16.msra.mxu0 %v1451
    %1993 = vmatprep.subr.bf16.mxu0 0
    %1994 = vmatpush1.bf16.msra.mxu0 %v1452
    %1995 = vmatprep.subr.bf16.mxu0 0
    %1996 = vmatpush1.bf16.msra.mxu0 %v1453
    %1997 = vmatprep.subr.bf16.mxu0 0
    %1998 = vmatpush1.bf16.msra.mxu0 %v1454
    %1999 = vmatprep.mubr.bf16.mxu0 %v173
    %2000 = vmatmul.mubr.bf16.gmra.mrb[0].mxu0 %v172
    %v2001 = vpop.f32.mrb[0].mxu0
    %v2002 = vadd.f32 %v1962, %v2001
    %v2003 = vpop.f32.mrb[0].mxu0
    %v2004 = vpop.f32.mrb[0].mxu0
    %v2005 = vpop.f32.mrb[0].mxu0
    %2006 = vdwg.mxu0
    %2007 = vmatprep.subr.bf16.mxu0 0
    %2008 = vmatpush1.bf16.msra.mxu0 %v1455
    %2009 = vmatprep.subr.bf16.mxu0 0
    %2010 = vmatpush1.bf16.msra.mxu0 %v1456
    %2011 = vmatprep.subr.bf16.mxu0 0
    %2012 = vmatpush1.bf16.msra.mxu0 %v1457
    %2013 = vmatprep.subr.bf16.mxu0 0
    %2014 = vmatpush1.bf16.msra.mxu0 %v1458
    %2015 = vmatprep.subr.bf16.mxu0 0
    %2016 = vmatpush1.bf16.msra.mxu0 %v1459
    %2017 = vmatprep.subr.bf16.mxu0 0
    %2018 = vmatpush1.bf16.msra.mxu0 %v1460
    %2019 = vmatprep.subr.bf16.mxu0 0
    %2020 = vmatpush1.bf16.msra.mxu0 %v1461
    %2021 = vmatprep.subr.bf16.mxu0 0
    %2022 = vmatpush1.bf16.msra.mxu0 %v1462
    %2023 = vmatprep.subr.bf16.mxu0 0
    %2024 = vmatpush1.bf16.msra.mxu0 %v1463
    %2025 = vmatprep.subr.bf16.mxu0 0
    %2026 = vmatpush1.bf16.msra.mxu0 %v1464
    %2027 = vmatprep.subr.bf16.mxu0 0
    %2028 = vmatpush1.bf16.msra.mxu0 %v1465
    %2029 = vmatprep.subr.bf16.mxu0 0
    %2030 = vmatpush1.bf16.msra.mxu0 %v1466
    %2031 = vmatprep.subr.bf16.mxu0 0
    %2032 = vmatpush1.bf16.msra.mxu0 %v1467
    %2033 = vmatprep.subr.bf16.mxu0 0
    %2034 = vmatpush1.bf16.msra.mxu0 %v1468
    %2035 = vmatprep.subr.bf16.mxu0 0
    %2036 = vmatpush1.bf16.msra.mxu0 %v1469
    %2037 = vmatprep.subr.bf16.mxu0 0
    %2038 = vmatpush1.bf16.msra.mxu0 %v1470
    %2039 = vmatprep.mubr.bf16.mxu0 %v175
    %2040 = vmatmul.mubr.bf16.gmra.mrb[0].mxu0 %v174
    %v2041 = vpop.f32.mrb[0].mxu0
    %v2042 = vadd.f32 %v2002, %v2041
    %v2043 = vpop.f32.mrb[0].mxu0
    %v2044 = vpop.f32.mrb[0].mxu0
    %v2045 = vpop.f32.mrb[0].mxu0
    %2046 = vdwg.mxu0
    %2047 = vmatprep.subr.bf16.mxu0 0
    %2048 = vmatpush1.bf16.msra.mxu0 %v1471
    %2049 = vmatprep.subr.bf16.mxu0 0
    %2050 = vmatpush1.bf16.msra.mxu0 %v1472
    %2051 = vmatprep.subr.bf16.mxu0 0
    %2052 = vmatpush1.bf16.msra.mxu0 %v1473
    %2053 = vmatprep.subr.bf16.mxu0 0
    %2054 = vmatpush1.bf16.msra.mxu0 %v1474
    %2055 = vmatprep.subr.bf16.mxu0 0
    %2056 = vmatpush1.bf16.msra.mxu0 %v1475
    %2057 = vmatprep.subr.bf16.mxu0 0
    %2058 = vmatpush1.bf16.msra.mxu0 %v1476
    %2059 = vmatprep.subr.bf16.mxu0 0
    %2060 = vmatpush1.bf16.msra.mxu0 %v1477
    %2061 = vmatprep.subr.bf16.mxu0 0
    %2062 = vmatpush1.bf16.msra.mxu0 %v1478
    %2063 = vmatprep.subr.bf16.mxu0 0
    %2064 = vmatpush1.bf16.msra.mxu0 %v1479
    %2065 = vmatprep.subr.bf16.mxu0 0
    %2066 = vmatpush1.bf16.msra.mxu0 %v1480
    %2067 = vmatprep.subr.bf16.mxu0 0
    %2068 = vmatpush1.bf16.msra.mxu0 %v1481
    %2069 = vmatprep.subr.bf16.mxu0 0
    %2070 = vmatpush1.bf16.msra.mxu0 %v1482
    %2071 = vmatprep.subr.bf16.mxu0 0
    %2072 = vmatpush1.bf16.msra.mxu0 %v1483
    %2073 = vmatprep.subr.bf16.mxu0 0
    %2074 = vmatpush1.bf16.msra.mxu0 %v1484
    %2075 = vmatprep.subr.bf16.mxu0 0
    %2076 = vmatpush1.bf16.msra.mxu0 %v1485
    %2077 = vmatprep.subr.bf16.mxu0 0
    %2078 = vmatpush1.bf16.msra.mxu0 %v1486
    %2079 = vmatprep.mubr.bf16.mxu0 %v177
    %2080 = vmatmul.mubr.bf16.gmra.mrb[0].mxu0 %v176
    %v2081 = vpop.f32.mrb[0].mxu0
    %v2082 = vadd.f32 %v2042, %v2081
    %v2083 = vpop.f32.mrb[0].mxu0
    %v2084 = vpop.f32.mrb[0].mxu0
    %v2085 = vpop.f32.mrb[0].mxu0
    %2086 = vdwg.mxu0
    %2087 = vmatprep.subr.bf16.mxu0 0
    %2088 = vmatpush1.bf16.msra.mxu0 %v1487
    %2089 = vmatprep.subr.bf16.mxu0 0
    %2090 = vmatpush1.bf16.msra.mxu0 %v1488
    %2091 = vmatprep.subr.bf16.mxu0 0
    %2092 = vmatpush1.bf16.msra.mxu0 %v1489
    %2093 = vmatprep.subr.bf16.mxu0 0
    %2094 = vmatpush1.bf16.msra.mxu0 %v1490
    %2095 = vmatprep.subr.bf16.mxu0 0
    %2096 = vmatpush1.bf16.msra.mxu0 %v1491
    %2097 = vmatprep.subr.bf16.mxu0 0
    %2098 = vmatpush1.bf16.msra.mxu0 %v1492
    %2099 = vmatprep.subr.bf16.mxu0 0
    %2100 = vmatpush1.bf16.msra.mxu0 %v1493
    %2101 = vmatprep.subr.bf16.mxu0 0
    %2102 = vmatpush1.bf16.msra.mxu0 %v1494
    %2103 = vmatprep.subr.bf16.mxu0 0
    %2104 = vmatpush1.bf16.msra.mxu0 %v1495
    %2105 = vmatprep.subr.bf16.mxu0 0
    %2106 = vmatpush1.bf16.msra.mxu0 %v1496
    %2107 = vmatprep.subr.bf16.mxu0 0
    %2108 = vmatpush1.bf16.msra.mxu0 %v1497
    %2109 = vmatprep.subr.bf16.mxu0 0
    %2110 = vmatpush1.bf16.msra.mxu0 %v1498
    %2111 = vmatprep.subr.bf16.mxu0 0
    %2112 = vmatpush1.bf16.msra.mxu0 %v1499
    %2113 = vmatprep.subr.bf16.mxu0 0
    %2114 = vmatpush1.bf16.msra.mxu0 %v1500
    %2115 = vmatprep.subr.bf16.mxu0 0
    %2116 = vmatpush1.bf16.msra.mxu0 %v1501
    %2117 = vmatprep.subr.bf16.mxu0 0
    %2118 = vmatpush1.bf16.msra.mxu0 %v1502
    %2119 = vmatprep.mubr.bf16.mxu0 %v179
    %2120 = vmatmul.mubr.bf16.gmra.mrb[0].mxu0 %v178
    %v2121 = vpop.f32.mrb[0].mxu0
    %v2122 = vadd.f32 %v2082, %v2121
    %v2123 = vpop.f32.mrb[0].mxu0
    %v2124 = vpop.f32.mrb[0].mxu0
    %v2125 = vpop.f32.mrb[0].mxu0
    %2126 = vdwg.mxu0
    %2127 = vmatprep.subr.bf16.mxu0 0
    %2128 = vmatpush1.bf16.msra.mxu0 %v1503
    %2129 = vmatprep.subr.bf16.mxu0 0
    %2130 = vmatpush1.bf16.msra.mxu0 %v1504
    %2131 = vmatprep.subr.bf16.mxu0 0
    %2132 = vmatpush1.bf16.msra.mxu0 %v1505
    %2133 = vmatprep.subr.bf16.mxu0 0
    %2134 = vmatpush1.bf16.msra.mxu0 %v1506
    %2135 = vmatprep.subr.bf16.mxu0 0
    %2136 = vmatpush1.bf16.msra.mxu0 %v1507
    %2137 = vmatprep.subr.bf16.mxu0 0
    %2138 = vmatpush1.bf16.msra.mxu0 %v1508
    %2139 = vmatprep.subr.bf16.mxu0 0
    %2140 = vmatpush1.bf16.msra.mxu0 %v1509
    %2141 = vmatprep.subr.bf16.mxu0 0
    %2142 = vmatpush1.bf16.msra.mxu0 %v1510
    %2143 = vmatprep.subr.bf16.mxu0 0
    %2144 = vmatpush1.bf16.msra.mxu0 %v1511
    %2145 = vmatprep.subr.bf16.mxu0 0
    %2146 = vmatpush1.bf16.msra.mxu0 %v1512
    %2147 = vmatprep.subr.bf16.mxu0 0
    %2148 = vmatpush1.bf16.msra.mxu0 %v1513
    %2149 = vmatprep.subr.bf16.mxu0 0
    %2150 = vmatpush1.bf16.msra.mxu0 %v1514
    %2151 = vmatprep.subr.bf16.mxu0 0
    %2152 = vmatpush1.bf16.msra.mxu0 %v1515
    %2153 = vmatprep.subr.bf16.mxu0 0
    %2154 = vmatpush1.bf16.msra.mxu0 %v1516
    %2155 = vmatprep.subr.bf16.mxu0 0
    %2156 = vmatpush1.bf16.msra.mxu0 %v1517
    %2157 = vmatprep.subr.bf16.mxu0 0
    %2158 = vmatpush1.bf16.msra.mxu0 %v1518
    %2159 = vmatprep.mubr.bf16.mxu0 %v181
    %2160 = vmatmul.mubr.bf16.gmra.mrb[0].mxu0 %v180
    %v2161 = vpop.f32.mrb[0].mxu0
    %v2162 = vadd.f32 %v2122, %v2161
    %v2163 = vpop.f32.mrb[0].mxu0
    %v2164 = vpop.f32.mrb[0].mxu0
    %v2165 = vpop.f32.mrb[0].mxu0
    %2166 = vdwg.mxu0
    %2167 = vmatprep.subr.bf16.mxu0 0
    %2168 = vmatpush1.bf16.msra.mxu0 %v1519
    %2169 = vmatprep.subr.bf16.mxu0 0
    %2170 = vmatpush1.bf16.msra.mxu0 %v1520
    %2171 = vmatprep.subr.bf16.mxu0 0
    %2172 = vmatpush1.bf16.msra.mxu0 %v1521
    %2173 = vmatprep.subr.bf16.mxu0 0
    %2174 = vmatpush1.bf16.msra.mxu0 %v1522
    %2175 = vmatprep.subr.bf16.mxu0 0
    %2176 = vmatpush1.bf16.msra.mxu0 %v1523
    %2177 = vmatprep.subr.bf16.mxu0 0
    %2178 = vmatpush1.bf16.msra.mxu0 %v1524
    %2179 = vmatprep.subr.bf16.mxu0 0
    %2180 = vmatpush1.bf16.msra.mxu0 %v1525
    %2181 = vmatprep.subr.bf16.mxu0 0
    %2182 = vmatpush1.bf16.msra.mxu0 %v1526
    %2183 = vmatprep.subr.bf16.mxu0 0
    %2184 = vmatpush1.bf16.msra.mxu0 %v1527
    %2185 = vmatprep.subr.bf16.mxu0 0
    %2186 = vmatpush1.bf16.msra.mxu0 %v1528
    %2187 = vmatprep.subr.bf16.mxu0 0
    %2188 = vmatpush1.bf16.msra.mxu0 %v1529
    %2189 = vmatprep.subr.bf16.mxu0 0
    %2190 = vmatpush1.bf16.msra.mxu0 %v1530
    %2191 = vmatprep.subr.bf16.mxu0 0
    %2192 = vmatpush1.bf16.msra.mxu0 %v1531
    %2193 = vmatprep.subr.bf16.mxu0 0
    %2194 = vmatpush1.bf16.msra.mxu0 %v1532
    %2195 = vmatprep.subr.bf16.mxu0 0
    %2196 = vmatpush1.bf16.msra.mxu0 %v1533
    %2197 = vmatprep.subr.bf16.mxu0 0
    %2198 = vmatpush1.bf16.msra.mxu0 %v1534
    %2199 = vmatprep.mubr.bf16.mxu0 %v183
    %2200 = vmatmul.mubr.bf16.gmra.mrb[0].mxu0 %v182
    %v2201 = vpop.f32.mrb[0].mxu0
    %v2202 = vadd.f32 %v2162, %v2201
    %v2203 = vpop.f32.mrb[0].mxu0
    %v2204 = vpop.f32.mrb[0].mxu0
    %v2205 = vpop.f32.mrb[0].mxu0
    %2206 = vdwg.mxu0
    %v2207 = vmax.f32 %v2202, 0.0
    %v2208 = vld [vmem:[%s3] sm:$0xff]
    %v2209 = vld [vmem:[%s3 + $0x8] sm:$0xff]
    %v2210 = vld [vmem:[%s3 + $0x10] sm:$0xff]
    %v2211 = vld [vmem:[%s3 + $0x18] sm:$0xff]
    %v2212 = vld [vmem:[%s3 + $0x20] sm:$0xff]
    %v2213 = vld [vmem:[%s3 + $0x28] sm:$0xff]
    %v2214 = vld [vmem:[%s3 + $0x30] sm:$0xff]
    %v2215 = vld [vmem:[%s3 + $0x38] sm:$0xff]
    %v2216 = vld [vmem:[%s4] sm:$0x1]
    %v2218 = vlaneseq
    %v2219 = vshrl.u32 %v2218, 7
    %v2220 = vsub.s32 0, %v2219
    %v2221 = vrot.slane %v2216, %v2220
    %vm2223 = vcmask 523264
    %v2225 = vsel %vm2223, %v2207, 0
    %2227 = vmatprep.subr.mxu0 0.0
    %2228 = vmatpush1.msra.mxu0 %v2208
    %2229 = vmatprep.subr.mxu0 0.0
    %2230 = vmatpush1.msra.mxu0 %v2209
    %2231 = vmatprep.subr.mxu0 0.0
    %2232 = vmatpush1.msra.mxu0 %v2210
    %2233 = vmatprep.subr.mxu0 0.0
    %2234 = vmatpush1.msra.mxu0 %v2211
    %2235 = vmatprep.subr.mxu0 0.0
    %2236 = vmatpush1.msra.mxu0 %v2212
    %2237 = vmatprep.subr.mxu0 0.0
    %2238 = vmatpush1.msra.mxu0 %v2213
    %2239 = vmatprep.subr.mxu0 0.0
    %2240 = vmatpush1.msra.mxu0 %v2214
    %2241 = vmatprep.subr.mxu0 0.0
    %2242 = vmatpush1.msra.mxu0 %v2215
    %2243 = vmatprep.subr.mxu0 0.0
    %2244 = vmatpush1.msra.mxu0 0.0
    %2245 = vmatprep.subr.mxu0 0.0
    %2246 = vmatpush1.msra.mxu0 0.0
    %2247 = vmatprep.subr.mxu0 0.0
    %2248 = vmatpush1.msra.mxu0 0.0
    %2249 = vmatprep.subr.mxu0 0.0
    %2250 = vmatpush1.msra.mxu0 0.0
    %2251 = vmatprep.subr.mxu0 0.0
    %2252 = vmatpush1.msra.mxu0 0.0
    %2253 = vmatprep.subr.mxu0 0.0
    %2254 = vmatpush1.msra.mxu0 0.0
    %2255 = vmatprep.subr.mxu0 0.0
    %2256 = vmatpush1.msra.mxu0 0.0
    %2257 = vmatprep.subr.mxu0 0.0
    %2258 = vmatpush1.msra.mxu0 0.0
    %2259 = vmatprep.subr.mxu0 0.0
    %2260 = vmatpush1.msra.mxu0 0.0
    %2261 = vmatprep.subr.mxu0 0.0
    %2262 = vmatpush1.msra.mxu0 0.0
    %2263 = vmatprep.subr.mxu0 0.0
    %2264 = vmatpush1.msra.mxu0 0.0
    %2265 = vmatprep.subr.mxu0 0.0
    %2266 = vmatpush1.msra.mxu0 0.0
    %2267 = vmatprep.subr.mxu0 0.0
    %2268 = vmatpush1.msra.mxu0 0.0
    %2269 = vmatprep.subr.mxu0 0.0
    %2270 = vmatpush1.msra.mxu0 0.0
    %2271 = vmatprep.subr.mxu0 0.0
    %2272 = vmatpush1.msra.mxu0 0.0
    %2273 = vmatprep.subr.mxu0 0.0
    %2274 = vmatpush1.msra.mxu0 0.0
    %2275 = vmatprep.subr.mxu0 0.0
    %2276 = vmatpush1.msra.mxu0 0.0
    %2277 = vmatprep.subr.mxu0 0.0
    %2278 = vmatpush1.msra.mxu0 0.0
    %2279 = vmatprep.subr.mxu0 0.0
    %2280 = vmatpush1.msra.mxu0 0.0
    %2281 = vmatprep.subr.mxu0 0.0
    %2282 = vmatpush1.msra.mxu0 0.0
    %2283 = vmatprep.subr.mxu0 0.0
    %2284 = vmatpush1.msra.mxu0 0.0
    %2285 = vmatprep.subr.mxu0 0.0
    %2286 = vmatpush1.msra.mxu0 0.0
    %2287 = vmatprep.subr.mxu0 0.0
    %2288 = vmatpush1.msra.mxu0 0.0
    %2289 = vmatprep.subr.mxu0 0.0
    %2290 = vmatpush1.msra.mxu0 0.0
    %2291 = vmatprep.mubr.f32.mxu0 0.0
    %2292 = vmatmul.mubr.f32.gmra.mrb[0].mxu0 %v2225
    %v2293 = vpop.f32.mrb[0].mxu0
    %v2294 = vadd.f32 %v2221, %v2293
    %v2295 = vpop.f32.mrb[0].mxu0
    %2296 = vdwg.mxu0
    %vm2297 = vcmask 1041408
    %v2298 = vsel %vm2297, %v2294, -inf
    %2299 = vmax.xlane.f32.xlu0 %v2298
    %v2300 = vpop.xlane.xlu0 %2299
    %v2301 = vsub.f32 %v2294, %v2300
    %v2302 = vmul.f32 %v2301, 1.442695
    %v2303 = vpow.pop %v2302
    %v2304 = vsel %vm2297, %v2303, 0.0
    %2305 = vadd.xlane.f32.xlu0 %v2304
    %v2306 = vpop.xlane.xlu0 %2305
    %v2307 = vrcp.pop %v2306
    %v2308 = vmul.f32 %v2303, %v2307
    %v2309 = vpack.c.bf16 %v2308, %v2308
    %2310 = vst [vmem:[#allocation2] sm:$0x1] %v2309
    // Predicated region
    $region22: #{tpu_custom_call.1} parent=1 // pred_check
      _
    $region23: #{tpu_custom_call.1} parent=1 // pred_check_branch
      %2312 = sbr.rel (0) target = $region25
    $region24: #{tpu_custom_call.1} parent=1 // pred_region
      %s2314 = ssub.s32 16, 16
      %2315 = vsyncadd [#allocation3], %s2314
      %s2317 = sshll.u32 [#allocation2], 4
      %s2318 = int_to_ptr.vmem [resolvable:$true] %s2317
      %2320 = dma.vmem_to_hbm [thread:$0]  %s2318, 16, %s5, [#allocation3]
    $region25: #{tpu_custom_call.1} parent=1 // pred_fallthru
      _
    // Predicated region
    $region26: #{tpu_custom_call.1} parent=1 // pred_check
      _
    $region27: #{tpu_custom_call.1} parent=1 // pred_check_branch
      %2322 = sbr.rel (0) target = $region29
    $region28: #{tpu_custom_call.1} parent=1 // pred_region
      %2323 = dma.done [#allocation3], 16
    $region29: #{tpu_custom_call.1} parent=1 // pred_fallthru
      _
    %2324 = vsyncpa [#allocation3], 1

</llo_original>
